<compile_context>
chip_gen: v5e
topology: v5e:2x2
jax: 0.10.0
libtpu: 0.0.40
codegen_flags: <defaults>
</compile_context>

<pallas_src>
import functools

import jax
import jax.numpy as jnp
from jax import lax
from jax.experimental import pallas as pl
from jax.experimental.pallas import tpu as pltpu

HIDDEN = 512                     # nn.Linear(input_size, 512)
VMEM_LIMIT = 32 * 1024 * 1024    # safe on v5e/v6e/v7x; far above what these tiles need


def _round_up(v, m):
    return ((v + m - 1) // m) * m


def _pow2_floor(v):
    p = 1
    while p * 2 <= v:
        p *= 2
    return p


def _choose_lane_tiling(n):
    """Pick (tile_n, h_chunk) for the lane-major path."""
    n128 = _round_up(n, 128)
    if n128 <= 128:
        tile_n = 128
    else:
        # ~2 grid steps: feeds both TensorCores on v7x via dimension_semantics
        # ("parallel",); costs one extra ~0.35us step on single-TC v5e/v6e.
        tile_n = min(1024, _round_up(n128 // 2, 128))
    # Size the hidden chunk so the (h_chunk, tile_n) f32 intermediates stay within
    # a handful of vregs (<= ~8-16 of the 64-vreg file) -> no spill traffic.
    h_chunk = _pow2_floor(max(16, min(128, 8192 // tile_n)))
    return tile_n, h_chunk


# ---------------------------------------------------------------------------
# Specialized path: input_size == 1 and output_size == 1 (the script's use case).
# Batch along lanes, pure VPU/EUP (+ one XLU reduce), lane-dense output.
# ---------------------------------------------------------------------------
def _bias_net_lane_kernel(x_ref, w1_ref, b1_ref, w2_ref, b2_ref, o_ref, *, h_chunk):
    # x_ref : (1, tile_n)   lane-dense batch tile (VMEM)
    # w1_ref: (HIDDEN, 1)   hidden_layer.weight  (512, 1)   (grid-resident)
    # b1_ref: (HIDDEN, 1)   hidden_layer.bias    (512, 1)
    # w2_ref: (HIDDEN, 1)   last_layer.weight^T  (512, 1)
    # b2_ref: (1,)          last_layer.bias scalar (SMEM)
    # o_ref : (1, tile_n)   lane-dense output tile
    tile_n = x_ref.shape[1]
    n_chunks = HIDDEN // h_chunk
    groups = h_chunk // 8

    # Hoisted sublane broadcast of x: computed once, reused by every unrolled chunk.
    xb = jnp.broadcast_to(x_ref[...], (h_chunk, tile_n))   # (h_chunk, tile_n)

    def body(c, acc8):
        j0 = pl.multiple_of(c * h_chunk, h_chunk)
        w1c = w1_ref[pl.ds(j0, h_chunk), :]                 # (h_chunk, 1)
        b1c = b1_ref[pl.ds(j0, h_chunk), :]
        w2c = w2_ref[pl.ds(j0, h_chunk), :]
        # Layer 1: lane-broadcast weight * x + bias, tanh  (VPU + EUP, no MXU).
        # (Weights are kept as (h_chunk, 1) columns; the per-chunk lane broadcast is
        #  cheap and not on the critical path, so no wrapper pre-broadcast needed.)
        h = jnp.tanh(w1c * xb + b1c)                        # (h_chunk, tile_n)
        # Layer 2 partial: multiply by w2 and fold h_chunk -> 8 sublanes with plain
        # VPU adds (layout-preserving reshape); keeps the XLU out of the inner loop.
        part = (h * w2c).reshape(groups, 8, tile_n).sum(axis=0)
        return acc8 + part                                  # (8, tile_n)

    acc8 = lax.fori_loop(0, n_chunks, body,
                         jnp.zeros((8, tile_n), jnp.float32), unroll=True)
    # Single 8->1 cross-sublane (XLU) reduce per tile + scalar bias from SMEM.
    y = acc8.sum(axis=0, keepdims=True) + b2_ref[0]
    o_ref[...] = y.astype(o_ref.dtype)


@functools.partial(jax.jit, static_argnames=("tile_n", "h_chunk"))
def _bias_net_forward_lane(x_lane, w1_col, b1_col, w2_col, b2_vec, *, tile_n, h_chunk):
    _, n_pad = x_lane.shape
    grid = (n_pad // tile_n,)
    kernel = functools.partial(_bias_net_lane_kernel, h_chunk=h_chunk)
    return pl.pallas_call(
        kernel,
        out_shape=jax.ShapeDtypeStruct((1, n_pad), x_lane.dtype),
        grid=grid,
        in_specs=[
            pl.BlockSpec((1, tile_n), lambda i: (0, i)),        # x tile (lane-dense)
            pl.BlockSpec((HIDDEN, 1), lambda i: (0, 0)),        # w1 (grid-resident)
            pl.BlockSpec((HIDDEN, 1), lambda i: (0, 0)),        # b1
            pl.BlockSpec((HIDDEN, 1), lambda i: (0, 0)),        # w2
            pl.BlockSpec(memory_space=pltpu.MemorySpace.SMEM),  # b2 scalar in SMEM
        ],
        out_specs=pl.BlockSpec((1, tile_n), lambda i: (0, i)),  # lane-dense output
        compiler_params=pltpu.CompilerParams(
            dimension_semantics=("parallel",),   # batch tiles shard across TCs (v7x)
            vmem_limit_bytes=VMEM_LIMIT,
        ),
    )(x_lane, w1_col, b1_col, w2_col, b2_vec)


# ---------------------------------------------------------------------------
# General path: input_size > 1 or output_size > 1 -> fused MXU kernel.
# Both matmuls are fused over 128-wide hidden chunks: no (tile_m, 512) VMEM scratch
# round trip, MXU and EUP (tanh) overlap per chunk.  Output columns are padded to a
# multiple of 128 in the wrapper so the store is lane-dense (unmasked vst).
# ---------------------------------------------------------------------------
def _bias_net_mxu_kernel(x_ref, w1_ref, b1_ref, w2_ref, b2_ref, o_ref):
    # x_ref : (tile_m, input_size)   f32 or bf16
    # w1_ref: (input_size, HIDDEN)   pre-transposed PyTorch weight
    # b1_ref: (1, HIDDEN)            f32
    # w2_ref: (HIDDEN, out_pad)      pre-transposed, column-padded to 128 lanes
    # b2_ref: (1, out_pad)           f32, column-padded
    # o_ref : (tile_m, out_pad)      f32, lane-dense
    x = x_ref[...]
    n_chunks = HIDDEN // 128

    def body(k, acc):
        j0 = pl.multiple_of(k * 128, 128)
        w1c = w1_ref[:, pl.ds(j0, 128)]                     # (in, 128)
        b1c = b1_ref[:, pl.ds(j0, 128)]                     # (1, 128)
        w2c = w2_ref[pl.ds(j0, 128), :]                     # (128, out_pad)
        # Default Mosaic precision for f32 inputs is multi-pass (near-full f32);
        # bf16 inputs (use_bf16=True in the wrapper) hit native MXU throughput.
        h = jnp.tanh(jnp.dot(x, w1c, preferred_element_type=jnp.float32) + b1c)
        return acc + jnp.dot(h.astype(w2c.dtype), w2c,
                             preferred_element_type=jnp.float32)

    acc = lax.fori_loop(0, n_chunks, body,
                        jnp.zeros(o_ref.shape, jnp.float32), unroll=True)
    o_ref[...] = (acc + b2_ref[...]).astype(o_ref.dtype)


@functools.partial(jax.jit, static_argnames=("tile_m",))
def _bias_net_forward_mxu(x, w1_t, b1_row, w2_t, b2_row, *, tile_m):
    n_pad, input_size = x.shape
    out_pad = w2_t.shape[1]
    grid = (n_pad // tile_m,)
    return pl.pallas_call(
        _bias_net_mxu_kernel,
        out_shape=jax.ShapeDtypeStruct((n_pad, out_pad), jnp.float32),
        grid=grid,
        in_specs=[
            pl.BlockSpec((tile_m, input_size), lambda i: (i, 0)),
            pl.BlockSpec((input_size, HIDDEN), lambda i: (0, 0)),
            pl.BlockSpec((1, HIDDEN), lambda i: (0, 0)),
            pl.BlockSpec((HIDDEN, out_pad), lambda i: (0, 0)),
            pl.BlockSpec((1, out_pad), lambda i: (0, 0)),
        ],
        out_specs=pl.BlockSpec((tile_m, out_pad), lambda i: (i, 0)),
        compiler_params=pltpu.CompilerParams(
            dimension_semantics=("parallel",),
            vmem_limit_bytes=VMEM_LIMIT,
        ),
    )(x, w1_t, b1_row, w2_t, b2_row)


# ---------------------------------------------------------------------------
# Public forward: params in PyTorch layout (weight: (out_features, in_features)).
# ---------------------------------------------------------------------------
def bias_net_forward(x, w1, b1, w2, b2, *, tile_n=None, use_bf16=False):
    """y = last_layer(tanh(hidden_layer(x)))."""
    n, input_size = x.shape
    output_size = w2.shape[0]

    if input_size == 1 and output_size == 1:
        # Degenerate Linear layers -> lane-major VPU/EUP path.
        if tile_n is None:
            t, h_chunk = _choose_lane_tiling(n)
        else:
            assert tile_n % 128 == 0, "tile_n must be a multiple of 128"
            t = tile_n
            h_chunk = _pow2_floor(max(16, min(128, 8192 // t)))
        assert HIDDEN % h_chunk == 0 and h_chunk % 8 == 0
        n_pad = _round_up(n, t)
        # NOTE: padded lanes carry garbage (tanh(b1)*w2 + b2); they are sliced off
        # below and must never be reduced over.
        x_lane = jnp.pad(x[:, 0], (0, n_pad - n)).reshape(1, n_pad)
        y_lane = _bias_net_forward_lane(
            x_lane,
            w1.reshape(HIDDEN, 1),
            b1.reshape(HIDDEN, 1),
            w2.reshape(HIDDEN, 1),      # (1, 512) -> (512, 1) column
            b2.reshape(1),              # scalar, lives in SMEM
            tile_n=t, h_chunk=h_chunk,
        )
        return y_lane[0, :n].reshape(n, 1)

    # General path: pre-transpose weights to (in, out), pad batch rows and output
    # columns (lane-dense stores), optionally cast to bf16 for MXU throughput.
    tile_m = 256 if tile_n is None else tile_n        # fills 256x256 MXU on v6e/v7x
    tile_m = min(tile_m, _round_up(n, 128))
    assert tile_m % 128 == 0, "tile_m must be a multiple of 128"
    n_pad = _round_up(n, tile_m)
    out_pad = _round_up(output_size, 128)

    x_p = x if n_pad == n else jnp.pad(x, ((0, n_pad - n), (0, 0)))
    w1_t = w1.T                                        # (in, HIDDEN)
    w2_t = jnp.pad(w2.T, ((0, 0), (0, out_pad - output_size)))   # (HIDDEN, out_pad)
    b2_row = jnp.pad(b2.reshape(1, -1), ((0, 0), (0, out_pad - output_size)))
    if use_bf16:
        x_p = x_p.astype(jnp.bfloat16)
        w1_t = w1_t.astype(jnp.bfloat16)
        w2_t = w2_t.astype(jnp.bfloat16)

    y = _bias_net_forward_mxu(x_p, w1_t, b1.reshape(1, HIDDEN), w2_t, b2_row,
                              tile_m=tile_m)
    return y[:n, :output_size]


# ---------------------------------------------------------------------------
# Params / reference (mirrors nn.Linear init and forward)
# ---------------------------------------------------------------------------
def init_bias_net_params(key, input_size, output_size, dtype=jnp.float32):
    k1, k2, k3, k4 = jax.random.split(key, 4)
    bound1 = 1.0 / float(input_size) ** 0.5
    bound2 = 1.0 / float(HIDDEN) ** 0.5
    # PyTorch layout: weight is (out_features, in_features)
    w1 = jax.random.uniform(k1, (HIDDEN, input_size), dtype, -bound1, bound1)
    b1 = jax.random.uniform(k2, (HIDDEN,), dtype, -bound1, bound1)
    w2 = jax.random.uniform(k3, (output_size, HIDDEN), dtype, -bound2, bound2)
    b2 = jax.random.uniform(k4, (output_size,), dtype, -bound2, bound2)
    return w1, b1, w2, b2


def bias_net_reference(x, w1, b1, w2, b2):
    h = jnp.tanh(jnp.dot(x, w1.T, precision=lax.Precision.HIGHEST) + b1[None, :])
    return jnp.dot(h, w2.T, precision=lax.Precision.HIGHEST) + b2[None, :]


if __name__ == "__main__":
    # Shapes implied by the original script: x = xm.reshape(-1, 1) -> input_size = 1,
    # Bias_Net(1, 1).  batch=256 -> auto-tiling picks tile_n=128 (2-step "parallel"
    # grid: both TCs on v7x, negligible extra step on v5e/v6e) with h_chunk=64.
    batch, input_size, output_size = 256, 1, 1

    key = jax.random.PRNGKey(0)
    kx, kp = jax.random.split(key)
    x = jax.random.normal(kx, (batch, input_size), jnp.float32)
    w1, b1, w2, b2 = init_bias_net_params(kp, input_size, output_size)

    out = jax.block_until_ready(bias_net_forward(x, w1, b1, w2, b2))
    ref = bias_net_reference(x, w1, b1, w2, b2)
    assert out.shape == (batch, output_size)
    assert jnp.allclose(out, ref, atol=1e-5, rtol=1e-5), "lane-path mismatch vs reference"

    # Smoke-test the general fused-MXU path (non-degenerate layer sizes), f32 + bf16.
    gin, gout, gbatch = 8, 16, 128
    xg = jax.random.normal(kx, (gbatch, gin), jnp.float32)
    w1g, b1g, w2g, b2g = init_bias_net_params(kp, gin, gout)
    refg = bias_net_reference(xg, w1g, b1g, w2g, b2g)

    outg = jax.block_until_ready(bias_net_forward(xg, w1g, b1g, w2g, b2g))
    assert outg.shape == (gbatch, gout)
    assert jnp.allclose(outg, refg, atol=1e-4, rtol=1e-4), "mxu-path (f32) mismatch"

    outg_bf16 = jax.block_until_ready(
        bias_net_forward(xg, w1g, b1g, w2g, b2g, use_bf16=True))
    assert jnp.allclose(outg_bf16, refg, atol=2e-2, rtol=2e-2), "mxu-path (bf16) mismatch"

    print("KERNEL_OK")
</pallas_src>

<mosaic_0001>
module attributes {stable_mosaic.version = 11 : i64} {
  func.func @_bias_net_lane_kernel(%arg0: i32, %arg1: memref<1x128xf32, #tpu.memory_space<vmem>>, %arg2: memref<512x1xf32, #tpu.memory_space<vmem>>, %arg3: memref<512x1xf32, #tpu.memory_space<vmem>>, %arg4: memref<512x1xf32, #tpu.memory_space<vmem>>, %arg5: memref<1xf32, #tpu.memory_space<smem>>, %arg6: memref<1x128xf32, #tpu.memory_space<vmem>>) attributes {dimension_semantics = [#tpu.dimension_semantics<parallel>], iteration_bounds = array<i64: 2>, scalar_prefetch = 0 : i64, scratch_operands = 0 : i64, tpu.core_type = #tpu.core_type<tc>, window_params = [{transform_indices = @transform_0, window_bounds = array<i64: 1, 128>}, {pipeline_mode = #tpu.pipeline_mode<synchronous>, transform_indices = @transform_1, window_bounds = array<i64: 512, 1>}, {pipeline_mode = #tpu.pipeline_mode<synchronous>, transform_indices = @transform_2, window_bounds = array<i64: 512, 1>}, {pipeline_mode = #tpu.pipeline_mode<synchronous>, transform_indices = @transform_3, window_bounds = array<i64: 512, 1>}, {transform_indices = @transform_4, window_bounds = array<i64: 1>}, {transform_indices = @transform_5, window_bounds = array<i64: 1, 128>}]} {
    %c0 = arith.constant 0 : index
    %c0_0 = arith.constant 0 : index
    %0 = vector.load %arg1[%c0, %c0_0] : memref<1x128xf32, #tpu.memory_space<vmem>>, vector<1x128xf32>
    %1 = vector.shape_cast %0 : vector<1x128xf32> to vector<1x128xf32>
    %2 = vector.broadcast %1 : vector<1x128xf32> to vector<64x128xf32>
    %cst = arith.constant 0.000000e+00 : f32
    %3 = vector.broadcast %cst : f32 to vector<8x128xf32>
    %c0_i32 = arith.constant 0 : i32
    %c64_i32 = arith.constant 64 : i32
    %4 = arith.muli %c0_i32, %c64_i32 : i32
    %5 = tpu.assume_multiple %4, 64 : i32
    %6 = arith.index_cast %5 : i32 to index
    %c0_1 = arith.constant 0 : index
    %7 = vector.load %arg2[%6, %c0_1] : memref<512x1xf32, #tpu.memory_space<vmem>>, vector<64x1xf32>
    %8 = arith.index_cast %5 : i32 to index
    %c0_2 = arith.constant 0 : index
    %9 = vector.load %arg3[%8, %c0_2] : memref<512x1xf32, #tpu.memory_space<vmem>>, vector<64x1xf32>
    %10 = arith.index_cast %5 : i32 to index
    %c0_3 = arith.constant 0 : index
    %11 = vector.load %arg4[%10, %c0_3] : memref<512x1xf32, #tpu.memory_space<vmem>>, vector<64x1xf32>
    %12 = vector.broadcast %7 : vector<64x1xf32> to vector<64x128xf32>
    %13 = arith.mulf %12, %2 : vector<64x128xf32>
    %14 = vector.broadcast %9 : vector<64x1xf32> to vector<64x128xf32>
    %15 = arith.addf %13, %14 : vector<64x128xf32>
    %16 = math.tanh %15 : vector<64x128xf32>
    %17 = vector.broadcast %11 : vector<64x1xf32> to vector<64x128xf32>
    %18 = arith.mulf %16, %17 : vector<64x128xf32>
    %19 = vector.shape_cast %18 : vector<64x128xf32> to vector<8x8x128xf32>
    %cst_4 = arith.constant dense<0.000000e+00> : vector<8x128xf32>
    %20 = vector.multi_reduction <add>, %19, %cst_4 [0] : vector<8x8x128xf32> to vector<8x128xf32>
    %21 = arith.addf %3, %20 : vector<8x128xf32>
    %c1_i32 = arith.constant 1 : i32
    %c64_i32_5 = arith.constant 64 : i32
    %22 = arith.muli %c1_i32, %c64_i32_5 : i32
    %23 = tpu.assume_multiple %22, 64 : i32
    %24 = arith.index_cast %23 : i32 to index
    %c0_6 = arith.constant 0 : index
    %25 = vector.load %arg2[%24, %c0_6] : memref<512x1xf32, #tpu.memory_space<vmem>>, vector<64x1xf32>
    %26 = arith.index_cast %23 : i32 to index
    %c0_7 = arith.constant 0 : index
    %27 = vector.load %arg3[%26, %c0_7] : memref<512x1xf32, #tpu.memory_space<vmem>>, vector<64x1xf32>
    %28 = arith.index_cast %23 : i32 to index
    %c0_8 = arith.constant 0 : index
    %29 = vector.load %arg4[%28, %c0_8] : memref<512x1xf32, #tpu.memory_space<vmem>>, vector<64x1xf32>
    %30 = vector.broadcast %25 : vector<64x1xf32> to vector<64x128xf32>
    %31 = arith.mulf %30, %2 : vector<64x128xf32>
    %32 = vector.broadcast %27 : vector<64x1xf32> to vector<64x128xf32>
    %33 = arith.addf %31, %32 : vector<64x128xf32>
    %34 = math.tanh %33 : vector<64x128xf32>
    %35 = vector.broadcast %29 : vector<64x1xf32> to vector<64x128xf32>
    %36 = arith.mulf %34, %35 : vector<64x128xf32>
    %37 = vector.shape_cast %36 : vector<64x128xf32> to vector<8x8x128xf32>
    %cst_9 = arith.constant dense<0.000000e+00> : vector<8x128xf32>
    %38 = vector.multi_reduction <add>, %37, %cst_9 [0] : vector<8x8x128xf32> to vector<8x128xf32>
    %39 = arith.addf %21, %38 : vector<8x128xf32>
    %c2_i32 = arith.constant 2 : i32
    %c64_i32_10 = arith.constant 64 : i32
    %40 = arith.muli %c2_i32, %c64_i32_10 : i32
    %41 = tpu.assume_multiple %40, 64 : i32
    %42 = arith.index_cast %41 : i32 to index
    %c0_11 = arith.constant 0 : index
    %43 = vector.load %arg2[%42, %c0_11] : memref<512x1xf32, #tpu.memory_space<vmem>>, vector<64x1xf32>
    %44 = arith.index_cast %41 : i32 to index
    %c0_12 = arith.constant 0 : index
    %45 = vector.load %arg3[%44, %c0_12] : memref<512x1xf32, #tpu.memory_space<vmem>>, vector<64x1xf32>
    %46 = arith.index_cast %41 : i32 to index
    %c0_13 = arith.constant 0 : index
    %47 = vector.load %arg4[%46, %c0_13] : memref<512x1xf32, #tpu.memory_space<vmem>>, vector<64x1xf32>
    %48 = vector.broadcast %43 : vector<64x1xf32> to vector<64x128xf32>
    %49 = arith.mulf %48, %2 : vector<64x128xf32>
    %50 = vector.broadcast %45 : vector<64x1xf32> to vector<64x128xf32>
    %51 = arith.addf %49, %50 : vector<64x128xf32>
    %52 = math.tanh %51 : vector<64x128xf32>
    %53 = vector.broadcast %47 : vector<64x1xf32> to vector<64x128xf32>
    %54 = arith.mulf %52, %53 : vector<64x128xf32>
    %55 = vector.shape_cast %54 : vector<64x128xf32> to vector<8x8x128xf32>
    %cst_14 = arith.constant dense<0.000000e+00> : vector<8x128xf32>
    %56 = vector.multi_reduction <add>, %55, %cst_14 [0] : vector<8x8x128xf32> to vector<8x128xf32>
    %57 = arith.addf %39, %56 : vector<8x128xf32>
    %c3_i32 = arith.constant 3 : i32
    %c64_i32_15 = arith.constant 64 : i32
    %58 = arith.muli %c3_i32, %c64_i32_15 : i32
    %59 = tpu.assume_multiple %58, 64 : i32
    %60 = arith.index_cast %59 : i32 to index
    %c0_16 = arith.constant 0 : index
    %61 = vector.load %arg2[%60, %c0_16] : memref<512x1xf32, #tpu.memory_space<vmem>>, vector<64x1xf32>
    %62 = arith.index_cast %59 : i32 to index
    %c0_17 = arith.constant 0 : index
    %63 = vector.load %arg3[%62, %c0_17] : memref<512x1xf32, #tpu.memory_space<vmem>>, vector<64x1xf32>
    %64 = arith.index_cast %59 : i32 to index
    %c0_18 = arith.constant 0 : index
    %65 = vector.load %arg4[%64, %c0_18] : memref<512x1xf32, #tpu.memory_space<vmem>>, vector<64x1xf32>
    %66 = vector.broadcast %61 : vector<64x1xf32> to vector<64x128xf32>
    %67 = arith.mulf %66, %2 : vector<64x128xf32>
    %68 = vector.broadcast %63 : vector<64x1xf32> to vector<64x128xf32>
    %69 = arith.addf %67, %68 : vector<64x128xf32>
    %70 = math.tanh %69 : vector<64x128xf32>
    %71 = vector.broadcast %65 : vector<64x1xf32> to vector<64x128xf32>
    %72 = arith.mulf %70, %71 : vector<64x128xf32>
    %73 = vector.shape_cast %72 : vector<64x128xf32> to vector<8x8x128xf32>
    %cst_19 = arith.constant dense<0.000000e+00> : vector<8x128xf32>
    %74 = vector.multi_reduction <add>, %73, %cst_19 [0] : vector<8x8x128xf32> to vector<8x128xf32>
    %75 = arith.addf %57, %74 : vector<8x128xf32>
    %c4_i32 = arith.constant 4 : i32
    %c64_i32_20 = arith.constant 64 : i32
    %76 = arith.muli %c4_i32, %c64_i32_20 : i32
    %77 = tpu.assume_multiple %76, 64 : i32
    %78 = arith.index_cast %77 : i32 to index
    %c0_21 = arith.constant 0 : index
    %79 = vector.load %arg2[%78, %c0_21] : memref<512x1xf32, #tpu.memory_space<vmem>>, vector<64x1xf32>
    %80 = arith.index_cast %77 : i32 to index
    %c0_22 = arith.constant 0 : index
    %81 = vector.load %arg3[%80, %c0_22] : memref<512x1xf32, #tpu.memory_space<vmem>>, vector<64x1xf32>
    %82 = arith.index_cast %77 : i32 to index
    %c0_23 = arith.constant 0 : index
    %83 = vector.load %arg4[%82, %c0_23] : memref<512x1xf32, #tpu.memory_space<vmem>>, vector<64x1xf32>
    %84 = vector.broadcast %79 : vector<64x1xf32> to vector<64x128xf32>
    %85 = arith.mulf %84, %2 : vector<64x128xf32>
    %86 = vector.broadcast %81 : vector<64x1xf32> to vector<64x128xf32>
    %87 = arith.addf %85, %86 : vector<64x128xf32>
    %88 = math.tanh %87 : vector<64x128xf32>
    %89 = vector.broadcast %83 : vector<64x1xf32> to vector<64x128xf32>
    %90 = arith.mulf %88, %89 : vector<64x128xf32>
    %91 = vector.shape_cast %90 : vector<64x128xf32> to vector<8x8x128xf32>
    %cst_24 = arith.constant dense<0.000000e+00> : vector<8x128xf32>
    %92 = vector.multi_reduction <add>, %91, %cst_24 [0] : vector<8x8x128xf32> to vector<8x128xf32>
    %93 = arith.addf %75, %92 : vector<8x128xf32>
    %c5_i32 = arith.constant 5 : i32
    %c64_i32_25 = arith.constant 64 : i32
    %94 = arith.muli %c5_i32, %c64_i32_25 : i32
    %95 = tpu.assume_multiple %94, 64 : i32
    %96 = arith.index_cast %95 : i32 to index
    %c0_26 = arith.constant 0 : index
    %97 = vector.load %arg2[%96, %c0_26] : memref<512x1xf32, #tpu.memory_space<vmem>>, vector<64x1xf32>
    %98 = arith.index_cast %95 : i32 to index
    %c0_27 = arith.constant 0 : index
    %99 = vector.load %arg3[%98, %c0_27] : memref<512x1xf32, #tpu.memory_space<vmem>>, vector<64x1xf32>
    %100 = arith.index_cast %95 : i32 to index
    %c0_28 = arith.constant 0 : index
    %101 = vector.load %arg4[%100, %c0_28] : memref<512x1xf32, #tpu.memory_space<vmem>>, vector<64x1xf32>
    %102 = vector.broadcast %97 : vector<64x1xf32> to vector<64x128xf32>
    %103 = arith.mulf %102, %2 : vector<64x128xf32>
    %104 = vector.broadcast %99 : vector<64x1xf32> to vector<64x128xf32>
    %105 = arith.addf %103, %104 : vector<64x128xf32>
    %106 = math.tanh %105 : vector<64x128xf32>
    %107 = vector.broadcast %101 : vector<64x1xf32> to vector<64x128xf32>
    %108 = arith.mulf %106, %107 : vector<64x128xf32>
    %109 = vector.shape_cast %108 : vector<64x128xf32> to vector<8x8x128xf32>
    %cst_29 = arith.constant dense<0.000000e+00> : vector<8x128xf32>
    %110 = vector.multi_reduction <add>, %109, %cst_29 [0] : vector<8x8x128xf32> to vector<8x128xf32>
    %111 = arith.addf %93, %110 : vector<8x128xf32>
    %c6_i32 = arith.constant 6 : i32
    %c64_i32_30 = arith.constant 64 : i32
    %112 = arith.muli %c6_i32, %c64_i32_30 : i32
    %113 = tpu.assume_multiple %112, 64 : i32
    %114 = arith.index_cast %113 : i32 to index
    %c0_31 = arith.constant 0 : index
    %115 = vector.load %arg2[%114, %c0_31] : memref<512x1xf32, #tpu.memory_space<vmem>>, vector<64x1xf32>
    %116 = arith.index_cast %113 : i32 to index
    %c0_32 = arith.constant 0 : index
    %117 = vector.load %arg3[%116, %c0_32] : memref<512x1xf32, #tpu.memory_space<vmem>>, vector<64x1xf32>
    %118 = arith.index_cast %113 : i32 to index
    %c0_33 = arith.constant 0 : index
    %119 = vector.load %arg4[%118, %c0_33] : memref<512x1xf32, #tpu.memory_space<vmem>>, vector<64x1xf32>
    %120 = vector.broadcast %115 : vector<64x1xf32> to vector<64x128xf32>
    %121 = arith.mulf %120, %2 : vector<64x128xf32>
    %122 = vector.broadcast %117 : vector<64x1xf32> to vector<64x128xf32>
    %123 = arith.addf %121, %122 : vector<64x128xf32>
    %124 = math.tanh %123 : vector<64x128xf32>
    %125 = vector.broadcast %119 : vector<64x1xf32> to vector<64x128xf32>
    %126 = arith.mulf %124, %125 : vector<64x128xf32>
    %127 = vector.shape_cast %126 : vector<64x128xf32> to vector<8x8x128xf32>
    %cst_34 = arith.constant dense<0.000000e+00> : vector<8x128xf32>
    %128 = vector.multi_reduction <add>, %127, %cst_34 [0] : vector<8x8x128xf32> to vector<8x128xf32>
    %129 = arith.addf %111, %128 : vector<8x128xf32>
    %c7_i32 = arith.constant 7 : i32
    %c64_i32_35 = arith.constant 64 : i32
    %130 = arith.muli %c7_i32, %c64_i32_35 : i32
    %131 = tpu.assume_multiple %130, 64 : i32
    %132 = arith.index_cast %131 : i32 to index
    %c0_36 = arith.constant 0 : index
    %133 = vector.load %arg2[%132, %c0_36] : memref<512x1xf32, #tpu.memory_space<vmem>>, vector<64x1xf32>
    %134 = arith.index_cast %131 : i32 to index
    %c0_37 = arith.constant 0 : index
    %135 = vector.load %arg3[%134, %c0_37] : memref<512x1xf32, #tpu.memory_space<vmem>>, vector<64x1xf32>
    %136 = arith.index_cast %131 : i32 to index
    %c0_38 = arith.constant 0 : index
    %137 = vector.load %arg4[%136, %c0_38] : memref<512x1xf32, #tpu.memory_space<vmem>>, vector<64x1xf32>
    %138 = vector.broadcast %133 : vector<64x1xf32> to vector<64x128xf32>
    %139 = arith.mulf %138, %2 : vector<64x128xf32>
    %140 = vector.broadcast %135 : vector<64x1xf32> to vector<64x128xf32>
    %141 = arith.addf %139, %140 : vector<64x128xf32>
    %142 = math.tanh %141 : vector<64x128xf32>
    %143 = vector.broadcast %137 : vector<64x1xf32> to vector<64x128xf32>
    %144 = arith.mulf %142, %143 : vector<64x128xf32>
    %145 = vector.shape_cast %144 : vector<64x128xf32> to vector<8x8x128xf32>
    %cst_39 = arith.constant dense<0.000000e+00> : vector<8x128xf32>
    %146 = vector.multi_reduction <add>, %145, %cst_39 [0] : vector<8x8x128xf32> to vector<8x128xf32>
    %147 = arith.addf %129, %146 : vector<8x128xf32>
    %c8_i32 = arith.constant 8 : i32
    %cst_40 = arith.constant dense<0.000000e+00> : vector<128xf32>
    %148 = vector.multi_reduction <add>, %147, %cst_40 [0] : vector<8x128xf32> to vector<128xf32>
    %149 = vector.shape_cast %148 : vector<128xf32> to vector<1x128xf32>
    %c0_41 = arith.constant 0 : index
    %150 = memref.load %arg5[%c0_41] : memref<1xf32, #tpu.memory_space<smem>>
    %151 = vector.broadcast %150 : f32 to vector<1x128xf32>
    %152 = arith.addf %149, %151 : vector<1x128xf32>
    %c0_42 = arith.constant 0 : index
    %c0_43 = arith.constant 0 : index
    %153 = vector.load %arg6[%c0_42, %c0_43] : memref<1x128xf32, #tpu.memory_space<vmem>>, vector<1x128xf32>
    tpu.vector_store %arg6[%c0_42, %c0_43], %152 {strides = array<i32>} : memref<1x128xf32, #tpu.memory_space<vmem>>, vector<1x128xf32>,
    return
  }
  func.func @transform_0(%arg0: i32) -> (i32, i32) {
    %c0_i32 = arith.constant 0 : i32
    %c0_i32_0 = arith.constant 0 : i32
    return %c0_i32, %arg0 : i32, i32
  }
  func.func @transform_1(%arg0: i32) -> (i32, i32) {
    %c0_i32 = arith.constant 0 : i32
    %c0_i32_0 = arith.constant 0 : i32
    %c0_i32_1 = arith.constant 0 : i32
    return %c0_i32, %c0_i32_0 : i32, i32
  }
  func.func @transform_2(%arg0: i32) -> (i32, i32) {
    %c0_i32 = arith.constant 0 : i32
    %c0_i32_0 = arith.constant 0 : i32
    %c0_i32_1 = arith.constant 0 : i32
    return %c0_i32, %c0_i32_0 : i32, i32
  }
  func.func @transform_3(%arg0: i32) -> (i32, i32) {
    %c0_i32 = arith.constant 0 : i32
    %c0_i32_0 = arith.constant 0 : i32
    %c0_i32_1 = arith.constant 0 : i32
    return %c0_i32, %c0_i32_0 : i32, i32
  }
  func.func @transform_4(%arg0: i32) -> i32 {
    %c0_i32 = arith.constant 0 : i32
    %c0_i32_0 = arith.constant 0 : i32
    return %c0_i32 : i32
  }
  func.func @transform_5(%arg0: i32) -> (i32, i32) {
    %c0_i32 = arith.constant 0 : i32
    %c0_i32_0 = arith.constant 0 : i32
    return %c0_i32, %arg0 : i32, i32
  }
}

</mosaic_0001>

<llo_original>
// kernel: _bias_net_forward_lane.1
$region0: #{_bias_net_forward_lane.1}
  #allocation0 [shape = 'u32[]', space=smem, size = 0x4, offset = 0x4, fixed_abs, tag = 'smem constant byte address 0x4 - core index']
  #allocation1 [shape = 'u32[72,128]{1,0:T(1,128)}', space=vmem, size = 0x9000, scoped, tag = 'internal scratch']
  #allocation2 [shape = 'f32[1]{0:T(128)S(6)}', space=smem, size = 0x200, scoped, tag = 'scoped memory for _bias_net_forward_lane.1']
  %s0 = inlined_call_operand.vmem [shape: f32[1,256], index: 0, kind: input, shape index: {}]
  %s1 = inlined_call_operand.vmem [shape: f32[512,1], index: 1, kind: input, shape index: {}]
  %s2 = inlined_call_operand.vmem [shape: f32[512,1], index: 2, kind: input, shape index: {}]
  %s3 = inlined_call_operand.vmem [shape: f32[512,1], index: 3, kind: input, shape index: {}]
  %s4 = inlined_call_operand.<no memory space> [shape: f32[1], index: 4, kind: input, shape index: {}]
  %s5 = inlined_call_operand.hbm [shape: f32[1,256], index: 5, kind: output, shape index: {}]
  %s6 = sld [smem:[#allocation0]]
  $region53: #{_bias_net_forward_lane.1} parent=0
    _
  %s8 = ssub.s32 1, %s6
  %s9 = scalar_select 0, %s8, %s6
  %10 = sst [smem:[#allocation2]] %s4
  $region1: #{_bias_net_forward_lane.1} parent=0
    #allocation3 [shape = 'u8[1024]{0}', space=vmem, size = 0x400, scoped, tag = 'output window, operand 0']
    #allocation4 [shape = 's32[2]{0}', space=sflag, size = 0x8, scoped, tag = 'scoped memory for _bias_net_forward_lane.1']
    %11 = vsyncpa [#allocation4], 0
    %s12 = scalar_lea.sflag [#allocation4], 1
    %13 = vsyncpa %s12, 0
    loop: start=0, step=1, limit=4
    $region2: #{_bias_net_forward_lane.1} parent=1 // loop_pre_header
      _
    $region3: #{_bias_net_forward_lane.1} parent=1 // loop_header
      %s15 = sphi 0, %s19
      %p16 = scmp.ge.s32.totalorder %s15, 4
      %s25 = sphi 0, %s27
      %s28 = sphi 0, %s25
      %s29 = sphi 0, %s28
      %s45 = sphi 0, %s29
      %s49 = sphi 0, %s49
      %s51 = sphi 0, %s49
      %s52 = sphi 0, %s51
      %s66 = sphi 0, %s52
      %s70 = sphi 0, %s70
      %s72 = sphi 0, %s70
      %s73 = sphi 0, %s72
      %s87 = sphi 0, %s73
      %s91 = sphi 0, %s91
      %s93 = sphi 0, %s91
      %s94 = sphi 0, %s93
      %s108 = sphi 0, %s94
      %s112 = sphi 0, %s112
      %s114 = sphi 0, %s112
      %s115 = sphi 0, %s114
      %s129 = sphi 0, %s115
      %s135 = sphi 0, %s137
      %s138 = sphi 0, %s135
      %s139 = sphi 0, %s138
      %s155 = sphi 0, %s139
    $region4: #{_bias_net_forward_lane.1} parent=1 // loop_header_branch
      %18 = sbr.rel (%p16) target = $region8
    $region5: #{_bias_net_forward_lane.1} parent=1 // loop_body
      %s20 = ssub.s32 %s15, 1
      %s21 = ssub.s32 %s15, 2
      %s22 = sadd.s32 %s15, 1
      %s23 = ssub.s32 %s15, %s22
      %p24 = scmp.eq.s32.totalorder %s23, 0
      %s26 = sadd.s32 %s25, 1
      %s27 = scalar_select %p24, %s25, %s26
      %p30 = pneg %p24
      %p31 = scmp.eq.s32.totalorder %s15, 1
      %p32 = por %p30, %p31
      %p33 = scmp.ne.s32.totalorder %s25, %s28
      %p34 = scmp.eq.s32.totalorder %s15, 0
      %p35 = por %p33, %p34
      %p36 = scmp.ne.s32.totalorder %s25, %s28
      %p37 = scmp.eq.s32.totalorder %s20, 1
      %p38 = por %p36, %p37
      %p39 = scmp.ne.s32.totalorder %s28, %s29
      %p40 = scmp.eq.s32.totalorder %s20, 0
      %p41 = por %p39, %p40
      %p42 = scmp.ne.s32.totalorder %s28, %s29
      %p43 = scmp.eq.s32.totalorder %s21, 1
      %p44 = por %p42, %p43
      %p46 = scmp.ne.s32.totalorder %s29, %s45
      %p47 = scmp.eq.s32.totalorder %s21, 0
      %p48 = por %p46, %p47
      %s50 = sadd.s32 %s49, 1
      %p53 = scmp.eq.s32.totalorder %s15, 1
      %p54 = scmp.ne.s32.totalorder %s49, %s51
      %p55 = scmp.eq.s32.totalorder %s15, 0
      %p56 = por %p54, %p55
      %p57 = scmp.ne.s32.totalorder %s49, %s51
      %p58 = scmp.eq.s32.totalorder %s20, 1
      %p59 = por %p57, %p58
      %p60 = scmp.ne.s32.totalorder %s51, %s52
      %p61 = scmp.eq.s32.totalorder %s20, 0
      %p62 = por %p60, %p61
      %p63 = scmp.ne.s32.totalorder %s51, %s52
      %p64 = scmp.eq.s32.totalorder %s21, 1
      %p65 = por %p63, %p64
      %p67 = scmp.ne.s32.totalorder %s52, %s66
      %p68 = scmp.eq.s32.totalorder %s21, 0
      %p69 = por %p67, %p68
      %s71 = sadd.s32 %s70, 1
      %p74 = scmp.eq.s32.totalorder %s15, 1
      %p75 = scmp.ne.s32.totalorder %s70, %s72
      %p76 = scmp.eq.s32.totalorder %s15, 0
      %p77 = por %p75, %p76
      %p78 = scmp.ne.s32.totalorder %s70, %s72
      %p79 = scmp.eq.s32.totalorder %s20, 1
      %p80 = por %p78, %p79
      %p81 = scmp.ne.s32.totalorder %s72, %s73
      %p82 = scmp.eq.s32.totalorder %s20, 0
      %p83 = por %p81, %p82
      %p84 = scmp.ne.s32.totalorder %s72, %s73
      %p85 = scmp.eq.s32.totalorder %s21, 1
      %p86 = por %p84, %p85
      %p88 = scmp.ne.s32.totalorder %s73, %s87
      %p89 = scmp.eq.s32.totalorder %s21, 0
      %p90 = por %p88, %p89
      %s92 = sadd.s32 %s91, 1
      %p95 = scmp.eq.s32.totalorder %s15, 1
      %p96 = scmp.ne.s32.totalorder %s91, %s93
      %p97 = scmp.eq.s32.totalorder %s15, 0
      %p98 = por %p96, %p97
      %p99 = scmp.ne.s32.totalorder %s91, %s93
      %p100 = scmp.eq.s32.totalorder %s20, 1
      %p101 = por %p99, %p100
      %p102 = scmp.ne.s32.totalorder %s93, %s94
      %p103 = scmp.eq.s32.totalorder %s20, 0
      %p104 = por %p102, %p103
      %p105 = scmp.ne.s32.totalorder %s93, %s94
      %p106 = scmp.eq.s32.totalorder %s21, 1
      %p107 = por %p105, %p106
      %p109 = scmp.ne.s32.totalorder %s94, %s108
      %p110 = scmp.eq.s32.totalorder %s21, 0
      %p111 = por %p109, %p110
      %s113 = sadd.s32 %s112, 1
      %p116 = scmp.eq.s32.totalorder %s15, 1
      %p117 = scmp.ne.s32.totalorder %s112, %s114
      %p118 = scmp.eq.s32.totalorder %s15, 0
      %p119 = por %p117, %p118
      %p120 = scmp.ne.s32.totalorder %s112, %s114
      %p121 = scmp.eq.s32.totalorder %s20, 1
      %p122 = por %p120, %p121
      %p123 = scmp.ne.s32.totalorder %s114, %s115
      %p124 = scmp.eq.s32.totalorder %s20, 0
      %p125 = por %p123, %p124
      %p126 = scmp.ne.s32.totalorder %s114, %s115
      %p127 = scmp.eq.s32.totalorder %s21, 1
      %p128 = por %p126, %p127
      %p130 = scmp.ne.s32.totalorder %s115, %s129
      %p131 = scmp.eq.s32.totalorder %s21, 0
      %p132 = por %p130, %p131
      %s133 = ssub.s32 %s15, %s22
      %p134 = scmp.eq.s32.totalorder %s133, 0
      %s136 = sadd.s32 %s135, 1
      %s137 = scalar_select %p134, %s135, %s136
      %p140 = pneg %p134
      %p141 = scmp.eq.s32.totalorder %s15, 1
      %p142 = por %p140, %p141
      %p143 = scmp.ne.s32.totalorder %s135, %s138
      %p144 = scmp.eq.s32.totalorder %s15, 0
      %p145 = por %p143, %p144
      %p146 = scmp.ne.s32.totalorder %s135, %s138
      %p147 = scmp.eq.s32.totalorder %s20, 1
      %p148 = por %p146, %p147
      %p149 = scmp.ne.s32.totalorder %s138, %s139
      %p150 = scmp.eq.s32.totalorder %s20, 0
      %p151 = por %p149, %p150
      %p152 = scmp.ne.s32.totalorder %s138, %s139
      %p153 = scmp.eq.s32.totalorder %s21, 1
      %p154 = por %p152, %p153
      %p156 = scmp.ne.s32.totalorder %s139, %s155
      %p157 = scmp.eq.s32.totalorder %s21, 0
      %p158 = por %p156, %p157
      %p159 = scmp.le.s32.totalorder 1, %s15
      %p160 = scmp.lt.s32.totalorder %s15, 3
      %p161 = pnand %p159, %p160
      %p162 = pneg %p161
      // Predicated region
      $region9: #{_bias_net_forward_lane.1} parent=5 // pred_check
        _
      $region10: #{_bias_net_forward_lane.1} parent=5 // pred_check_branch
        %164 = sbr.rel (%p161) target = $region12
      $region11: #{_bias_net_forward_lane.1} parent=5 // pred_region
        %s165 = ssub.s32 %s15, 1
        // Predicated region
        $region13: #{_bias_net_forward_lane.1} parent=11 // pred_check
          %p166 = pneg %p62
        $region14: #{_bias_net_forward_lane.1} parent=11 // pred_check_branch
          %168 = sbr.rel (%p166) target = $region16
        $region15: #{_bias_net_forward_lane.1} parent=11 // pred_region
          _
        $region16: #{_bias_net_forward_lane.1} parent=11 // pred_fallthru
          _
        // Predicated region
        $region17: #{_bias_net_forward_lane.1} parent=11 // pred_check
          %p169 = pneg %p83
        $region18: #{_bias_net_forward_lane.1} parent=11 // pred_check_branch
          %171 = sbr.rel (%p169) target = $region20
        $region19: #{_bias_net_forward_lane.1} parent=11 // pred_region
          _
        $region20: #{_bias_net_forward_lane.1} parent=11 // pred_fallthru
          _
        // Predicated region
        $region21: #{_bias_net_forward_lane.1} parent=11 // pred_check
          %p172 = pneg %p104
        $region22: #{_bias_net_forward_lane.1} parent=11 // pred_check_branch
          %174 = sbr.rel (%p172) target = $region24
        $region23: #{_bias_net_forward_lane.1} parent=11 // pred_region
          _
        $region24: #{_bias_net_forward_lane.1} parent=11 // pred_fallthru
          _
        // Predicated region
        $region25: #{_bias_net_forward_lane.1} parent=11 // pred_check
          %p175 = pneg %p125
        $region26: #{_bias_net_forward_lane.1} parent=11 // pred_check_branch
          %177 = sbr.rel (%p175) target = $region28
        $region27: #{_bias_net_forward_lane.1} parent=11 // pred_region
          _
        $region28: #{_bias_net_forward_lane.1} parent=11 // pred_fallthru
          _
      $region12: #{_bias_net_forward_lane.1} parent=5 // pred_fallthru
        _
      %p178 = scmp.lt.s32.totalorder %s15, 2
      // Predicated region
      $region29: #{_bias_net_forward_lane.1} parent=5 // pred_check
        %p179 = pneg %p178
      $region30: #{_bias_net_forward_lane.1} parent=5 // pred_check_branch
        %181 = sbr.rel (%p179) target = $region32
      $region31: #{_bias_net_forward_lane.1} parent=5 // pred_region
        // Predicated region
        $region33: #{_bias_net_forward_lane.1} parent=31 // pred_check
          %p182 = pneg %p35
        $region34: #{_bias_net_forward_lane.1} parent=31 // pred_check_branch
          %184 = sbr.rel (%p182) target = $region36
        $region35: #{_bias_net_forward_lane.1} parent=31 // pred_region
          %p185 = scmp.lt.s32.totalorder %s15, 1
          %s186 = scalar_select %p185, %s15, 1
          %s187 = scalar_lea.vmem %s0, %s186
        $region36: #{_bias_net_forward_lane.1} parent=31 // pred_fallthru
          _
      $region32: #{_bias_net_forward_lane.1} parent=5 // pred_fallthru
        _
      %p188 = scmp.le.s32.totalorder 1, %s15
      %p189 = scmp.lt.s32.totalorder %s15, 3
      %p190 = pnand %p188, %p189
      %p191 = pneg %p190
      // Predicated region
      $region37: #{_bias_net_forward_lane.1} parent=5 // pred_check
        _
      $region38: #{_bias_net_forward_lane.1} parent=5 // pred_check_branch
        %193 = sbr.rel (%p190) target = $region40
      $region39: #{_bias_net_forward_lane.1} parent=5 // pred_region
        %s194 = ssub.s32 %s15, 1
        %p195 = scmp.lt.s32.totalorder %s20, 1
        %s196 = scalar_select %p195, %s20, 1
        %s197 = scalar_lea.vmem %s0, %s196
        %p198 = pneg %p41
        %p199 = pneg %p38
        %p200 = pneg %p62
        %p201 = pneg %p59
        %p202 = pneg %p83
        %p203 = pneg %p80
        %p204 = pneg %p104
        %p205 = pneg %p101
        %p206 = pneg %p125
        %p207 = pneg %p122
        %p208 = pneg %p151
        %p209 = pneg %p148
        %s210 = sand.u32 %s138, 1
        %s211 = scalar_lea.sflag [#allocation4], %s210
        %s212 = sand.u32 %s138, 1
        %s213 = scalar_lea.vmem [#allocation3], %s212
        %p214 = scmp.lt.s32.totalorder %s20, 1
        %s215 = scalar_select %p214, %s20, 1
        %s216 = scalar_lea.vmem %s0, %s215
        %v217 = vld [vmem:[%s216] sm:$0x1]
        %v219 = vperm.slane %v217, 0
        %v221 = vld [vmem:[%s1] sm:$0xff]
        %v222 = vld [vmem:[%s1 + $0x8] sm:$0xff]
        %v223 = vld [vmem:[%s1 + $0x10] sm:$0xff]
        %v224 = vld [vmem:[%s1 + $0x18] sm:$0xff]
        %v225 = vld [vmem:[%s1 + $0x20] sm:$0xff]
        %v226 = vld [vmem:[%s1 + $0x28] sm:$0xff]
        %v227 = vld [vmem:[%s1 + $0x30] sm:$0xff]
        %v228 = vld [vmem:[%s1 + $0x38] sm:$0xff]
        %v229 = vld [vmem:[%s2] sm:$0xff]
        %v230 = vld [vmem:[%s2 + $0x8] sm:$0xff]
        %v231 = vld [vmem:[%s2 + $0x10] sm:$0xff]
        %v232 = vld [vmem:[%s2 + $0x18] sm:$0xff]
        %v233 = vld [vmem:[%s2 + $0x20] sm:$0xff]
        %v234 = vld [vmem:[%s2 + $0x28] sm:$0xff]
        %v235 = vld [vmem:[%s2 + $0x30] sm:$0xff]
        %v236 = vld [vmem:[%s2 + $0x38] sm:$0xff]
        %v237 = vld [vmem:[%s3] sm:$0xff]
        %v238 = vld [vmem:[%s3 + $0x8] sm:$0xff]
        %v239 = vld [vmem:[%s3 + $0x10] sm:$0xff]
        %v240 = vld [vmem:[%s3 + $0x18] sm:$0xff]
        %v241 = vld [vmem:[%s3 + $0x20] sm:$0xff]
        %v242 = vld [vmem:[%s3 + $0x28] sm:$0xff]
        %v243 = vld [vmem:[%s3 + $0x30] sm:$0xff]
        %v244 = vld [vmem:[%s3 + $0x38] sm:$0xff]
        %246 = vset.pattern.permute.xlu0 0
        %247 = vperm.xlu0 %246, %v221
        %v248 = vpop.permute.xlu0 %247
        %251 = vset.pattern.permute.xlu0 0
        %252 = vperm.xlu0 %251, %v222
        %v253 = vpop.permute.xlu0 %252
        %256 = vset.pattern.permute.xlu0 0
        %257 = vperm.xlu0 %256, %v223
        %v258 = vpop.permute.xlu0 %257
        %261 = vset.pattern.permute.xlu0 0
        %262 = vperm.xlu0 %261, %v224
        %v263 = vpop.permute.xlu0 %262
        %266 = vset.pattern.permute.xlu0 0
        %267 = vperm.xlu0 %266, %v225
        %v268 = vpop.permute.xlu0 %267
        %271 = vset.pattern.permute.xlu0 0
        %272 = vperm.xlu0 %271, %v226
        %v273 = vpop.permute.xlu0 %272
        %276 = vset.pattern.permute.xlu0 0
        %277 = vperm.xlu0 %276, %v227
        %v278 = vpop.permute.xlu0 %277
        %281 = vset.pattern.permute.xlu0 0
        %282 = vperm.xlu0 %281, %v228
        %v283 = vpop.permute.xlu0 %282
        %v285 = vmul.f32 %v248, %v219
        %v286 = vmul.f32 %v253, %v219
        %v287 = vmul.f32 %v258, %v219
        %v288 = vmul.f32 %v263, %v219
        %v289 = vmul.f32 %v268, %v219
        %v290 = vmul.f32 %v273, %v219
        %v291 = vmul.f32 %v278, %v219
        %v292 = vmul.f32 %v283, %v219
        %294 = vset.pattern.permute.xlu0 0
        %295 = vperm.xlu0 %294, %v229
        %v296 = vpop.permute.xlu0 %295
        %299 = vset.pattern.permute.xlu0 0
        %300 = vperm.xlu0 %299, %v230
        %v301 = vpop.permute.xlu0 %300
        %304 = vset.pattern.permute.xlu0 0
        %305 = vperm.xlu0 %304, %v231
        %v306 = vpop.permute.xlu0 %305
        %309 = vset.pattern.permute.xlu0 0
        %310 = vperm.xlu0 %309, %v232
        %v311 = vpop.permute.xlu0 %310
        %314 = vset.pattern.permute.xlu0 0
        %315 = vperm.xlu0 %314, %v233
        %v316 = vpop.permute.xlu0 %315
        %319 = vset.pattern.permute.xlu0 0
        %320 = vperm.xlu0 %319, %v234
        %v321 = vpop.permute.xlu0 %320
        %324 = vset.pattern.permute.xlu0 0
        %325 = vperm.xlu0 %324, %v235
        %v326 = vpop.permute.xlu0 %325
        %329 = vset.pattern.permute.xlu0 0
        %330 = vperm.xlu0 %329, %v236
        %v331 = vpop.permute.xlu0 %330
        %v333 = vadd.f32 %v285, %v296
        %v334 = vadd.f32 %v286, %v301
        %v335 = vadd.f32 %v287, %v306
        %v336 = vadd.f32 %v288, %v311
        %v337 = vadd.f32 %v289, %v316
        %v338 = vadd.f32 %v290, %v321
        %v339 = vadd.f32 %v291, %v326
        %v340 = vadd.f32 %v292, %v331
        %v341 = vtanh.pop %v333
        %v342 = vtanh.pop %v334
        %v343 = vtanh.pop %v335
        %v344 = vtanh.pop %v336
        %v345 = vtanh.pop %v337
        %v346 = vtanh.pop %v338
        %v347 = vtanh.pop %v339
        %v348 = vtanh.pop %v340
        %350 = vset.pattern.permute.xlu0 0
        %351 = vperm.xlu0 %350, %v237
        %v352 = vpop.permute.xlu0 %351
        %355 = vset.pattern.permute.xlu0 0
        %356 = vperm.xlu0 %355, %v238
        %v357 = vpop.permute.xlu0 %356
        %360 = vset.pattern.permute.xlu0 0
        %361 = vperm.xlu0 %360, %v239
        %v362 = vpop.permute.xlu0 %361
        %365 = vset.pattern.permute.xlu0 0
        %366 = vperm.xlu0 %365, %v240
        %v367 = vpop.permute.xlu0 %366
        %370 = vset.pattern.permute.xlu0 0
        %371 = vperm.xlu0 %370, %v241
        %v372 = vpop.permute.xlu0 %371
        %375 = vset.pattern.permute.xlu0 0
        %376 = vperm.xlu0 %375, %v242
        %v377 = vpop.permute.xlu0 %376
        %380 = vset.pattern.permute.xlu0 0
        %381 = vperm.xlu0 %380, %v243
        %v382 = vpop.permute.xlu0 %381
        %385 = vset.pattern.permute.xlu0 0
        %386 = vperm.xlu0 %385, %v244
        %v387 = vpop.permute.xlu0 %386
        %v389 = vmul.f32 %v341, %v352
        %v390 = vmul.f32 %v342, %v357
        %v391 = vmul.f32 %v343, %v362
        %v392 = vmul.f32 %v344, %v367
        %v393 = vmul.f32 %v345, %v372
        %v394 = vmul.f32 %v346, %v377
        %v395 = vmul.f32 %v347, %v382
        %v396 = vmul.f32 %v348, %v387
        %v397 = vadd.f32 %v389, %v390
        %v398 = vadd.f32 %v397, %v391
        %v399 = vadd.f32 %v398, %v392
        %v400 = vadd.f32 %v399, %v393
        %v401 = vadd.f32 %v400, %v394
        %v402 = vadd.f32 %v401, %v395
        %v403 = vadd.f32 %v402, %v396
        %v404 = vadd.f32 %v403, 0.0
        %s405 = scalar_lea.vmem %s1, 64
        %v406 = vld [vmem:[%s405] sm:$0xff]
        %v407 = vld [vmem:[%s405 + $0x8] sm:$0xff]
        %v408 = vld [vmem:[%s405 + $0x10] sm:$0xff]
        %v409 = vld [vmem:[%s405 + $0x18] sm:$0xff]
        %v410 = vld [vmem:[%s405 + $0x20] sm:$0xff]
        %v411 = vld [vmem:[%s405 + $0x28] sm:$0xff]
        %v412 = vld [vmem:[%s405 + $0x30] sm:$0xff]
        %v413 = vld [vmem:[%s405 + $0x38] sm:$0xff]
        %s414 = scalar_lea.vmem %s2, 64
        %v415 = vld [vmem:[%s414] sm:$0xff]
        %v416 = vld [vmem:[%s414 + $0x8] sm:$0xff]
        %v417 = vld [vmem:[%s414 + $0x10] sm:$0xff]
        %v418 = vld [vmem:[%s414 + $0x18] sm:$0xff]
        %v419 = vld [vmem:[%s414 + $0x20] sm:$0xff]
        %v420 = vld [vmem:[%s414 + $0x28] sm:$0xff]
        %v421 = vld [vmem:[%s414 + $0x30] sm:$0xff]
        %v422 = vld [vmem:[%s414 + $0x38] sm:$0xff]
        %s423 = scalar_lea.vmem %s3, 64
        %v424 = vld [vmem:[%s423] sm:$0xff]
        %v425 = vld [vmem:[%s423 + $0x8] sm:$0xff]
        %v426 = vld [vmem:[%s423 + $0x10] sm:$0xff]
        %v427 = vld [vmem:[%s423 + $0x18] sm:$0xff]
        %v428 = vld [vmem:[%s423 + $0x20] sm:$0xff]
        %v429 = vld [vmem:[%s423 + $0x28] sm:$0xff]
        %v430 = vld [vmem:[%s423 + $0x30] sm:$0xff]
        %v431 = vld [vmem:[%s423 + $0x38] sm:$0xff]
        %433 = vset.pattern.permute.xlu0 0
        %434 = vperm.xlu0 %433, %v406
        %v435 = vpop.permute.xlu0 %434
        %438 = vset.pattern.permute.xlu0 0
        %439 = vperm.xlu0 %438, %v407
        %v440 = vpop.permute.xlu0 %439
        %443 = vset.pattern.permute.xlu0 0
        %444 = vperm.xlu0 %443, %v408
        %v445 = vpop.permute.xlu0 %444
        %448 = vset.pattern.permute.xlu0 0
        %449 = vperm.xlu0 %448, %v409
        %v450 = vpop.permute.xlu0 %449
        %453 = vset.pattern.permute.xlu0 0
        %454 = vperm.xlu0 %453, %v410
        %v455 = vpop.permute.xlu0 %454
        %458 = vset.pattern.permute.xlu0 0
        %459 = vperm.xlu0 %458, %v411
        %v460 = vpop.permute.xlu0 %459
        %463 = vset.pattern.permute.xlu0 0
        %464 = vperm.xlu0 %463, %v412
        %v465 = vpop.permute.xlu0 %464
        %468 = vset.pattern.permute.xlu0 0
        %469 = vperm.xlu0 %468, %v413
        %v470 = vpop.permute.xlu0 %469
        %v472 = vmul.f32 %v435, %v219
        %v473 = vmul.f32 %v440, %v219
        %v474 = vmul.f32 %v445, %v219
        %v475 = vmul.f32 %v450, %v219
        %v476 = vmul.f32 %v455, %v219
        %v477 = vmul.f32 %v460, %v219
        %v478 = vmul.f32 %v465, %v219
        %v479 = vmul.f32 %v470, %v219
        %481 = vset.pattern.permute.xlu0 0
        %482 = vperm.xlu0 %481, %v415
        %v483 = vpop.permute.xlu0 %482
        %486 = vset.pattern.permute.xlu0 0
        %487 = vperm.xlu0 %486, %v416
        %v488 = vpop.permute.xlu0 %487
        %491 = vset.pattern.permute.xlu0 0
        %492 = vperm.xlu0 %491, %v417
        %v493 = vpop.permute.xlu0 %492
        %496 = vset.pattern.permute.xlu0 0
        %497 = vperm.xlu0 %496, %v418
        %v498 = vpop.permute.xlu0 %497
        %501 = vset.pattern.permute.xlu0 0
        %502 = vperm.xlu0 %501, %v419
        %v503 = vpop.permute.xlu0 %502
        %506 = vset.pattern.permute.xlu0 0
        %507 = vperm.xlu0 %506, %v420
        %v508 = vpop.permute.xlu0 %507
        %511 = vset.pattern.permute.xlu0 0
        %512 = vperm.xlu0 %511, %v421
        %v513 = vpop.permute.xlu0 %512
        %516 = vset.pattern.permute.xlu0 0
        %517 = vperm.xlu0 %516, %v422
        %v518 = vpop.permute.xlu0 %517
        %v520 = vadd.f32 %v472, %v483
        %v521 = vadd.f32 %v473, %v488
        %v522 = vadd.f32 %v474, %v493
        %v523 = vadd.f32 %v475, %v498
        %v524 = vadd.f32 %v476, %v503
        %v525 = vadd.f32 %v477, %v508
        %v526 = vadd.f32 %v478, %v513
        %v527 = vadd.f32 %v479, %v518
        %v528 = vtanh.pop %v520
        %v529 = vtanh.pop %v521
        %v530 = vtanh.pop %v522
        %v531 = vtanh.pop %v523
        %v532 = vtanh.pop %v524
        %v533 = vtanh.pop %v525
        %v534 = vtanh.pop %v526
        %v535 = vtanh.pop %v527
        %537 = vset.pattern.permute.xlu0 0
        %538 = vperm.xlu0 %537, %v424
        %v539 = vpop.permute.xlu0 %538
        %542 = vset.pattern.permute.xlu0 0
        %543 = vperm.xlu0 %542, %v425
        %v544 = vpop.permute.xlu0 %543
        %547 = vset.pattern.permute.xlu0 0
        %548 = vperm.xlu0 %547, %v426
        %v549 = vpop.permute.xlu0 %548
        %552 = vset.pattern.permute.xlu0 0
        %553 = vperm.xlu0 %552, %v427
        %v554 = vpop.permute.xlu0 %553
        %557 = vset.pattern.permute.xlu0 0
        %558 = vperm.xlu0 %557, %v428
        %v559 = vpop.permute.xlu0 %558
        %562 = vset.pattern.permute.xlu0 0
        %563 = vperm.xlu0 %562, %v429
        %v564 = vpop.permute.xlu0 %563
        %567 = vset.pattern.permute.xlu0 0
        %568 = vperm.xlu0 %567, %v430
        %v569 = vpop.permute.xlu0 %568
        %572 = vset.pattern.permute.xlu0 0
        %573 = vperm.xlu0 %572, %v431
        %v574 = vpop.permute.xlu0 %573
        %v576 = vmul.f32 %v528, %v539
        %v577 = vmul.f32 %v529, %v544
        %v578 = vmul.f32 %v530, %v549
        %v579 = vmul.f32 %v531, %v554
        %v580 = vmul.f32 %v532, %v559
        %v581 = vmul.f32 %v533, %v564
        %v582 = vmul.f32 %v534, %v569
        %v583 = vmul.f32 %v535, %v574
        %v584 = vadd.f32 %v576, %v577
        %v585 = vadd.f32 %v584, %v578
        %v586 = vadd.f32 %v585, %v579
        %v587 = vadd.f32 %v586, %v580
        %v588 = vadd.f32 %v587, %v581
        %v589 = vadd.f32 %v588, %v582
        %v590 = vadd.f32 %v589, %v583
        %v591 = vadd.f32 %v404, %v590
        %s592 = scalar_lea.vmem %s1, 128
        %v593 = vld [vmem:[%s592] sm:$0xff]
        %v594 = vld [vmem:[%s592 + $0x8] sm:$0xff]
        %v595 = vld [vmem:[%s592 + $0x10] sm:$0xff]
        %v596 = vld [vmem:[%s592 + $0x18] sm:$0xff]
        %v597 = vld [vmem:[%s592 + $0x20] sm:$0xff]
        %v598 = vld [vmem:[%s592 + $0x28] sm:$0xff]
        %v599 = vld [vmem:[%s592 + $0x30] sm:$0xff]
        %v600 = vld [vmem:[%s592 + $0x38] sm:$0xff]
        %s601 = scalar_lea.vmem %s2, 128
        %v602 = vld [vmem:[%s601] sm:$0xff]
        %v603 = vld [vmem:[%s601 + $0x8] sm:$0xff]
        %v604 = vld [vmem:[%s601 + $0x10] sm:$0xff]
        %v605 = vld [vmem:[%s601 + $0x18] sm:$0xff]
        %v606 = vld [vmem:[%s601 + $0x20] sm:$0xff]
        %v607 = vld [vmem:[%s601 + $0x28] sm:$0xff]
        %v608 = vld [vmem:[%s601 + $0x30] sm:$0xff]
        %v609 = vld [vmem:[%s601 + $0x38] sm:$0xff]
        %s610 = scalar_lea.vmem %s3, 128
        %v611 = vld [vmem:[%s610] sm:$0xff]
        %v612 = vld [vmem:[%s610 + $0x8] sm:$0xff]
        %v613 = vld [vmem:[%s610 + $0x10] sm:$0xff]
        %v614 = vld [vmem:[%s610 + $0x18] sm:$0xff]
        %v615 = vld [vmem:[%s610 + $0x20] sm:$0xff]
        %v616 = vld [vmem:[%s610 + $0x28] sm:$0xff]
        %v617 = vld [vmem:[%s610 + $0x30] sm:$0xff]
        %v618 = vld [vmem:[%s610 + $0x38] sm:$0xff]
        %620 = vset.pattern.permute.xlu0 0
        %621 = vperm.xlu0 %620, %v593
        %v622 = vpop.permute.xlu0 %621
        %625 = vset.pattern.permute.xlu0 0
        %626 = vperm.xlu0 %625, %v594
        %v627 = vpop.permute.xlu0 %626
        %630 = vset.pattern.permute.xlu0 0
        %631 = vperm.xlu0 %630, %v595
        %v632 = vpop.permute.xlu0 %631
        %635 = vset.pattern.permute.xlu0 0
        %636 = vperm.xlu0 %635, %v596
        %v637 = vpop.permute.xlu0 %636
        %640 = vset.pattern.permute.xlu0 0
        %641 = vperm.xlu0 %640, %v597
        %v642 = vpop.permute.xlu0 %641
        %645 = vset.pattern.permute.xlu0 0
        %646 = vperm.xlu0 %645, %v598
        %v647 = vpop.permute.xlu0 %646
        %650 = vset.pattern.permute.xlu0 0
        %651 = vperm.xlu0 %650, %v599
        %v652 = vpop.permute.xlu0 %651
        %655 = vset.pattern.permute.xlu0 0
        %656 = vperm.xlu0 %655, %v600
        %v657 = vpop.permute.xlu0 %656
        %v659 = vmul.f32 %v622, %v219
        %v660 = vmul.f32 %v627, %v219
        %v661 = vmul.f32 %v632, %v219
        %v662 = vmul.f32 %v637, %v219
        %v663 = vmul.f32 %v642, %v219
        %v664 = vmul.f32 %v647, %v219
        %v665 = vmul.f32 %v652, %v219
        %v666 = vmul.f32 %v657, %v219
        %668 = vset.pattern.permute.xlu0 0
        %669 = vperm.xlu0 %668, %v602
        %v670 = vpop.permute.xlu0 %669
        %673 = vset.pattern.permute.xlu0 0
        %674 = vperm.xlu0 %673, %v603
        %v675 = vpop.permute.xlu0 %674
        %678 = vset.pattern.permute.xlu0 0
        %679 = vperm.xlu0 %678, %v604
        %v680 = vpop.permute.xlu0 %679
        %683 = vset.pattern.permute.xlu0 0
        %684 = vperm.xlu0 %683, %v605
        %v685 = vpop.permute.xlu0 %684
        %688 = vset.pattern.permute.xlu0 0
        %689 = vperm.xlu0 %688, %v606
        %v690 = vpop.permute.xlu0 %689
        %693 = vset.pattern.permute.xlu0 0
        %694 = vperm.xlu0 %693, %v607
        %v695 = vpop.permute.xlu0 %694
        %698 = vset.pattern.permute.xlu0 0
        %699 = vperm.xlu0 %698, %v608
        %v700 = vpop.permute.xlu0 %699
        %703 = vset.pattern.permute.xlu0 0
        %704 = vperm.xlu0 %703, %v609
        %v705 = vpop.permute.xlu0 %704
        %v707 = vadd.f32 %v659, %v670
        %v708 = vadd.f32 %v660, %v675
        %v709 = vadd.f32 %v661, %v680
        %v710 = vadd.f32 %v662, %v685
        %v711 = vadd.f32 %v663, %v690
        %v712 = vadd.f32 %v664, %v695
        %v713 = vadd.f32 %v665, %v700
        %v714 = vadd.f32 %v666, %v705
        %v715 = vtanh.pop %v707
        %v716 = vtanh.pop %v708
        %v717 = vtanh.pop %v709
        %v718 = vtanh.pop %v710
        %v719 = vtanh.pop %v711
        %v720 = vtanh.pop %v712
        %v721 = vtanh.pop %v713
        %v722 = vtanh.pop %v714
        %724 = vset.pattern.permute.xlu0 0
        %725 = vperm.xlu0 %724, %v611
        %v726 = vpop.permute.xlu0 %725
        %729 = vset.pattern.permute.xlu0 0
        %730 = vperm.xlu0 %729, %v612
        %v731 = vpop.permute.xlu0 %730
        %734 = vset.pattern.permute.xlu0 0
        %735 = vperm.xlu0 %734, %v613
        %v736 = vpop.permute.xlu0 %735
        %739 = vset.pattern.permute.xlu0 0
        %740 = vperm.xlu0 %739, %v614
        %v741 = vpop.permute.xlu0 %740
        %744 = vset.pattern.permute.xlu0 0
        %745 = vperm.xlu0 %744, %v615
        %v746 = vpop.permute.xlu0 %745
        %749 = vset.pattern.permute.xlu0 0
        %750 = vperm.xlu0 %749, %v616
        %v751 = vpop.permute.xlu0 %750
        %754 = vset.pattern.permute.xlu0 0
        %755 = vperm.xlu0 %754, %v617
        %v756 = vpop.permute.xlu0 %755
        %759 = vset.pattern.permute.xlu0 0
        %760 = vperm.xlu0 %759, %v618
        %v761 = vpop.permute.xlu0 %760
        %v763 = vmul.f32 %v715, %v726
        %v764 = vmul.f32 %v716, %v731
        %v765 = vmul.f32 %v717, %v736
        %v766 = vmul.f32 %v718, %v741
        %v767 = vmul.f32 %v719, %v746
        %v768 = vmul.f32 %v720, %v751
        %v769 = vmul.f32 %v721, %v756
        %v770 = vmul.f32 %v722, %v761
        %v771 = vadd.f32 %v763, %v764
        %v772 = vadd.f32 %v771, %v765
        %v773 = vadd.f32 %v772, %v766
        %v774 = vadd.f32 %v773, %v767
        %v775 = vadd.f32 %v774, %v768
        %v776 = vadd.f32 %v775, %v769
        %v777 = vadd.f32 %v776, %v770
        %v778 = vadd.f32 %v591, %v777
        %s779 = scalar_lea.vmem %s1, 192
        %v780 = vld [vmem:[%s779] sm:$0xff]
        %v781 = vld [vmem:[%s779 + $0x8] sm:$0xff]
        %v782 = vld [vmem:[%s779 + $0x10] sm:$0xff]
        %v783 = vld [vmem:[%s779 + $0x18] sm:$0xff]
        %v784 = vld [vmem:[%s779 + $0x20] sm:$0xff]
        %v785 = vld [vmem:[%s779 + $0x28] sm:$0xff]
        %v786 = vld [vmem:[%s779 + $0x30] sm:$0xff]
        %v787 = vld [vmem:[%s779 + $0x38] sm:$0xff]
        %s788 = scalar_lea.vmem %s2, 192
        %v789 = vld [vmem:[%s788] sm:$0xff]
        %v790 = vld [vmem:[%s788 + $0x8] sm:$0xff]
        %v791 = vld [vmem:[%s788 + $0x10] sm:$0xff]
        %v792 = vld [vmem:[%s788 + $0x18] sm:$0xff]
        %v793 = vld [vmem:[%s788 + $0x20] sm:$0xff]
        %v794 = vld [vmem:[%s788 + $0x28] sm:$0xff]
        %v795 = vld [vmem:[%s788 + $0x30] sm:$0xff]
        %v796 = vld [vmem:[%s788 + $0x38] sm:$0xff]
        %s797 = scalar_lea.vmem %s3, 192
        %v798 = vld [vmem:[%s797] sm:$0xff]
        %v799 = vld [vmem:[%s797 + $0x8] sm:$0xff]
        %v800 = vld [vmem:[%s797 + $0x10] sm:$0xff]
        %v801 = vld [vmem:[%s797 + $0x18] sm:$0xff]
        %v802 = vld [vmem:[%s797 + $0x20] sm:$0xff]
        %v803 = vld [vmem:[%s797 + $0x28] sm:$0xff]
        %v804 = vld [vmem:[%s797 + $0x30] sm:$0xff]
        %v805 = vld [vmem:[%s797 + $0x38] sm:$0xff]
        %807 = vset.pattern.permute.xlu0 0
        %808 = vperm.xlu0 %807, %v780
        %v809 = vpop.permute.xlu0 %808
        %812 = vset.pattern.permute.xlu0 0
        %813 = vperm.xlu0 %812, %v781
        %v814 = vpop.permute.xlu0 %813
        %817 = vset.pattern.permute.xlu0 0
        %818 = vperm.xlu0 %817, %v782
        %v819 = vpop.permute.xlu0 %818
        %822 = vset.pattern.permute.xlu0 0
        %823 = vperm.xlu0 %822, %v783
        %v824 = vpop.permute.xlu0 %823
        %827 = vset.pattern.permute.xlu0 0
        %828 = vperm.xlu0 %827, %v784
        %v829 = vpop.permute.xlu0 %828
        %832 = vset.pattern.permute.xlu0 0
        %833 = vperm.xlu0 %832, %v785
        %v834 = vpop.permute.xlu0 %833
        %837 = vset.pattern.permute.xlu0 0
        %838 = vperm.xlu0 %837, %v786
        %v839 = vpop.permute.xlu0 %838
        %842 = vset.pattern.permute.xlu0 0
        %843 = vperm.xlu0 %842, %v787
        %v844 = vpop.permute.xlu0 %843
        %v846 = vmul.f32 %v809, %v219
        %v847 = vmul.f32 %v814, %v219
        %v848 = vmul.f32 %v819, %v219
        %v849 = vmul.f32 %v824, %v219
        %v850 = vmul.f32 %v829, %v219
        %v851 = vmul.f32 %v834, %v219
        %v852 = vmul.f32 %v839, %v219
        %v853 = vmul.f32 %v844, %v219
        %855 = vset.pattern.permute.xlu0 0
        %856 = vperm.xlu0 %855, %v789
        %v857 = vpop.permute.xlu0 %856
        %860 = vset.pattern.permute.xlu0 0
        %861 = vperm.xlu0 %860, %v790
        %v862 = vpop.permute.xlu0 %861
        %865 = vset.pattern.permute.xlu0 0
        %866 = vperm.xlu0 %865, %v791
        %v867 = vpop.permute.xlu0 %866
        %870 = vset.pattern.permute.xlu0 0
        %871 = vperm.xlu0 %870, %v792
        %v872 = vpop.permute.xlu0 %871
        %875 = vset.pattern.permute.xlu0 0
        %876 = vperm.xlu0 %875, %v793
        %v877 = vpop.permute.xlu0 %876
        %880 = vset.pattern.permute.xlu0 0
        %881 = vperm.xlu0 %880, %v794
        %v882 = vpop.permute.xlu0 %881
        %885 = vset.pattern.permute.xlu0 0
        %886 = vperm.xlu0 %885, %v795
        %v887 = vpop.permute.xlu0 %886
        %890 = vset.pattern.permute.xlu0 0
        %891 = vperm.xlu0 %890, %v796
        %v892 = vpop.permute.xlu0 %891
        %v894 = vadd.f32 %v846, %v857
        %v895 = vadd.f32 %v847, %v862
        %v896 = vadd.f32 %v848, %v867
        %v897 = vadd.f32 %v849, %v872
        %v898 = vadd.f32 %v850, %v877
        %v899 = vadd.f32 %v851, %v882
        %v900 = vadd.f32 %v852, %v887
        %v901 = vadd.f32 %v853, %v892
        %v902 = vtanh.pop %v894
        %v903 = vtanh.pop %v895
        %v904 = vtanh.pop %v896
        %v905 = vtanh.pop %v897
        %v906 = vtanh.pop %v898
        %v907 = vtanh.pop %v899
        %v908 = vtanh.pop %v900
        %v909 = vtanh.pop %v901
        %911 = vset.pattern.permute.xlu0 0
        %912 = vperm.xlu0 %911, %v798
        %v913 = vpop.permute.xlu0 %912
        %916 = vset.pattern.permute.xlu0 0
        %917 = vperm.xlu0 %916, %v799
        %v918 = vpop.permute.xlu0 %917
        %921 = vset.pattern.permute.xlu0 0
        %922 = vperm.xlu0 %921, %v800
        %v923 = vpop.permute.xlu0 %922
        %926 = vset.pattern.permute.xlu0 0
        %927 = vperm.xlu0 %926, %v801
        %v928 = vpop.permute.xlu0 %927
        %931 = vset.pattern.permute.xlu0 0
        %932 = vperm.xlu0 %931, %v802
        %v933 = vpop.permute.xlu0 %932
        %936 = vset.pattern.permute.xlu0 0
        %937 = vperm.xlu0 %936, %v803
        %v938 = vpop.permute.xlu0 %937
        %941 = vset.pattern.permute.xlu0 0
        %942 = vperm.xlu0 %941, %v804
        %v943 = vpop.permute.xlu0 %942
        %946 = vset.pattern.permute.xlu0 0
        %947 = vperm.xlu0 %946, %v805
        %v948 = vpop.permute.xlu0 %947
        %v950 = vmul.f32 %v902, %v913
        %v951 = vmul.f32 %v903, %v918
        %v952 = vmul.f32 %v904, %v923
        %v953 = vmul.f32 %v905, %v928
        %v954 = vmul.f32 %v906, %v933
        %v955 = vmul.f32 %v907, %v938
        %v956 = vmul.f32 %v908, %v943
        %v957 = vmul.f32 %v909, %v948
        %v958 = vadd.f32 %v950, %v951
        %v959 = vadd.f32 %v958, %v952
        %v960 = vadd.f32 %v959, %v953
        %v961 = vadd.f32 %v960, %v954
        %v962 = vadd.f32 %v961, %v955
        %v963 = vadd.f32 %v962, %v956
        %v964 = vadd.f32 %v963, %v957
        %v965 = vadd.f32 %v778, %v964
        %s966 = scalar_lea.vmem %s1, 256
        %v967 = vld [vmem:[%s966] sm:$0xff]
        %v968 = vld [vmem:[%s966 + $0x8] sm:$0xff]
        %v969 = vld [vmem:[%s966 + $0x10] sm:$0xff]
        %v970 = vld [vmem:[%s966 + $0x18] sm:$0xff]
        %v971 = vld [vmem:[%s966 + $0x20] sm:$0xff]
        %v972 = vld [vmem:[%s966 + $0x28] sm:$0xff]
        %v973 = vld [vmem:[%s966 + $0x30] sm:$0xff]
        %v974 = vld [vmem:[%s966 + $0x38] sm:$0xff]
        %s975 = scalar_lea.vmem %s2, 256
        %v976 = vld [vmem:[%s975] sm:$0xff]
        %v977 = vld [vmem:[%s975 + $0x8] sm:$0xff]
        %v978 = vld [vmem:[%s975 + $0x10] sm:$0xff]
        %v979 = vld [vmem:[%s975 + $0x18] sm:$0xff]
        %v980 = vld [vmem:[%s975 + $0x20] sm:$0xff]
        %v981 = vld [vmem:[%s975 + $0x28] sm:$0xff]
        %v982 = vld [vmem:[%s975 + $0x30] sm:$0xff]
        %v983 = vld [vmem:[%s975 + $0x38] sm:$0xff]
        %s984 = scalar_lea.vmem %s3, 256
        %v985 = vld [vmem:[%s984] sm:$0xff]
        %v986 = vld [vmem:[%s984 + $0x8] sm:$0xff]
        %v987 = vld [vmem:[%s984 + $0x10] sm:$0xff]
        %v988 = vld [vmem:[%s984 + $0x18] sm:$0xff]
        %v989 = vld [vmem:[%s984 + $0x20] sm:$0xff]
        %v990 = vld [vmem:[%s984 + $0x28] sm:$0xff]
        %v991 = vld [vmem:[%s984 + $0x30] sm:$0xff]
        %v992 = vld [vmem:[%s984 + $0x38] sm:$0xff]
        %994 = vset.pattern.permute.xlu0 0
        %995 = vperm.xlu0 %994, %v967
        %v996 = vpop.permute.xlu0 %995
        %999 = vset.pattern.permute.xlu0 0
        %1000 = vperm.xlu0 %999, %v968
        %v1001 = vpop.permute.xlu0 %1000
        %1004 = vset.pattern.permute.xlu0 0
        %1005 = vperm.xlu0 %1004, %v969
        %v1006 = vpop.permute.xlu0 %1005
        %1009 = vset.pattern.permute.xlu0 0
        %1010 = vperm.xlu0 %1009, %v970
        %v1011 = vpop.permute.xlu0 %1010
        %1014 = vset.pattern.permute.xlu0 0
        %1015 = vperm.xlu0 %1014, %v971
        %v1016 = vpop.permute.xlu0 %1015
        %1019 = vset.pattern.permute.xlu0 0
        %1020 = vperm.xlu0 %1019, %v972
        %v1021 = vpop.permute.xlu0 %1020
        %1024 = vset.pattern.permute.xlu0 0
        %1025 = vperm.xlu0 %1024, %v973
        %v1026 = vpop.permute.xlu0 %1025
        %1029 = vset.pattern.permute.xlu0 0
        %1030 = vperm.xlu0 %1029, %v974
        %v1031 = vpop.permute.xlu0 %1030
        %v1033 = vmul.f32 %v996, %v219
        %v1034 = vmul.f32 %v1001, %v219
        %v1035 = vmul.f32 %v1006, %v219
        %v1036 = vmul.f32 %v1011, %v219
        %v1037 = vmul.f32 %v1016, %v219
        %v1038 = vmul.f32 %v1021, %v219
        %v1039 = vmul.f32 %v1026, %v219
        %v1040 = vmul.f32 %v1031, %v219
        %1042 = vset.pattern.permute.xlu0 0
        %1043 = vperm.xlu0 %1042, %v976
        %v1044 = vpop.permute.xlu0 %1043
        %1047 = vset.pattern.permute.xlu0 0
        %1048 = vperm.xlu0 %1047, %v977
        %v1049 = vpop.permute.xlu0 %1048
        %1052 = vset.pattern.permute.xlu0 0
        %1053 = vperm.xlu0 %1052, %v978
        %v1054 = vpop.permute.xlu0 %1053
        %1057 = vset.pattern.permute.xlu0 0
        %1058 = vperm.xlu0 %1057, %v979
        %v1059 = vpop.permute.xlu0 %1058
        %1062 = vset.pattern.permute.xlu0 0
        %1063 = vperm.xlu0 %1062, %v980
        %v1064 = vpop.permute.xlu0 %1063
        %1067 = vset.pattern.permute.xlu0 0
        %1068 = vperm.xlu0 %1067, %v981
        %v1069 = vpop.permute.xlu0 %1068
        %1072 = vset.pattern.permute.xlu0 0
        %1073 = vperm.xlu0 %1072, %v982
        %v1074 = vpop.permute.xlu0 %1073
        %1077 = vset.pattern.permute.xlu0 0
        %1078 = vperm.xlu0 %1077, %v983
        %v1079 = vpop.permute.xlu0 %1078
        %v1081 = vadd.f32 %v1033, %v1044
        %v1082 = vadd.f32 %v1034, %v1049
        %v1083 = vadd.f32 %v1035, %v1054
        %v1084 = vadd.f32 %v1036, %v1059
        %v1085 = vadd.f32 %v1037, %v1064
        %v1086 = vadd.f32 %v1038, %v1069
        %v1087 = vadd.f32 %v1039, %v1074
        %v1088 = vadd.f32 %v1040, %v1079
        %v1089 = vtanh.pop %v1081
        %v1090 = vtanh.pop %v1082
        %v1091 = vtanh.pop %v1083
        %v1092 = vtanh.pop %v1084
        %v1093 = vtanh.pop %v1085
        %v1094 = vtanh.pop %v1086
        %v1095 = vtanh.pop %v1087
        %v1096 = vtanh.pop %v1088
        %1098 = vset.pattern.permute.xlu0 0
        %1099 = vperm.xlu0 %1098, %v985
        %v1100 = vpop.permute.xlu0 %1099
        %1103 = vset.pattern.permute.xlu0 0
        %1104 = vperm.xlu0 %1103, %v986
        %v1105 = vpop.permute.xlu0 %1104
        %1108 = vset.pattern.permute.xlu0 0
        %1109 = vperm.xlu0 %1108, %v987
        %v1110 = vpop.permute.xlu0 %1109
        %1113 = vset.pattern.permute.xlu0 0
        %1114 = vperm.xlu0 %1113, %v988
        %v1115 = vpop.permute.xlu0 %1114
        %1118 = vset.pattern.permute.xlu0 0
        %1119 = vperm.xlu0 %1118, %v989
        %v1120 = vpop.permute.xlu0 %1119
        %1123 = vset.pattern.permute.xlu0 0
        %1124 = vperm.xlu0 %1123, %v990
        %v1125 = vpop.permute.xlu0 %1124
        %1128 = vset.pattern.permute.xlu0 0
        %1129 = vperm.xlu0 %1128, %v991
        %v1130 = vpop.permute.xlu0 %1129
        %1133 = vset.pattern.permute.xlu0 0
        %1134 = vperm.xlu0 %1133, %v992
        %v1135 = vpop.permute.xlu0 %1134
        %v1137 = vmul.f32 %v1089, %v1100
        %v1138 = vmul.f32 %v1090, %v1105
        %v1139 = vmul.f32 %v1091, %v1110
        %v1140 = vmul.f32 %v1092, %v1115
        %v1141 = vmul.f32 %v1093, %v1120
        %v1142 = vmul.f32 %v1094, %v1125
        %v1143 = vmul.f32 %v1095, %v1130
        %v1144 = vmul.f32 %v1096, %v1135
        %v1145 = vadd.f32 %v1137, %v1138
        %v1146 = vadd.f32 %v1145, %v1139
        %v1147 = vadd.f32 %v1146, %v1140
        %v1148 = vadd.f32 %v1147, %v1141
        %v1149 = vadd.f32 %v1148, %v1142
        %v1150 = vadd.f32 %v1149, %v1143
        %v1151 = vadd.f32 %v1150, %v1144
        %v1152 = vadd.f32 %v965, %v1151
        %s1153 = scalar_lea.vmem %s1, 320
        %v1154 = vld [vmem:[%s1153] sm:$0xff]
        %v1155 = vld [vmem:[%s1153 + $0x8] sm:$0xff]
        %v1156 = vld [vmem:[%s1153 + $0x10] sm:$0xff]
        %v1157 = vld [vmem:[%s1153 + $0x18] sm:$0xff]
        %v1158 = vld [vmem:[%s1153 + $0x20] sm:$0xff]
        %v1159 = vld [vmem:[%s1153 + $0x28] sm:$0xff]
        %v1160 = vld [vmem:[%s1153 + $0x30] sm:$0xff]
        %v1161 = vld [vmem:[%s1153 + $0x38] sm:$0xff]
        %s1162 = scalar_lea.vmem %s2, 320
        %v1163 = vld [vmem:[%s1162] sm:$0xff]
        %v1164 = vld [vmem:[%s1162 + $0x8] sm:$0xff]
        %v1165 = vld [vmem:[%s1162 + $0x10] sm:$0xff]
        %v1166 = vld [vmem:[%s1162 + $0x18] sm:$0xff]
        %v1167 = vld [vmem:[%s1162 + $0x20] sm:$0xff]
        %v1168 = vld [vmem:[%s1162 + $0x28] sm:$0xff]
        %v1169 = vld [vmem:[%s1162 + $0x30] sm:$0xff]
        %v1170 = vld [vmem:[%s1162 + $0x38] sm:$0xff]
        %s1171 = scalar_lea.vmem %s3, 320
        %v1172 = vld [vmem:[%s1171] sm:$0xff]
        %v1173 = vld [vmem:[%s1171 + $0x8] sm:$0xff]
        %v1174 = vld [vmem:[%s1171 + $0x10] sm:$0xff]
        %v1175 = vld [vmem:[%s1171 + $0x18] sm:$0xff]
        %v1176 = vld [vmem:[%s1171 + $0x20] sm:$0xff]
        %v1177 = vld [vmem:[%s1171 + $0x28] sm:$0xff]
        %v1178 = vld [vmem:[%s1171 + $0x30] sm:$0xff]
        %v1179 = vld [vmem:[%s1171 + $0x38] sm:$0xff]
        %1181 = vset.pattern.permute.xlu0 0
        %1182 = vperm.xlu0 %1181, %v1154
        %v1183 = vpop.permute.xlu0 %1182
        %1186 = vset.pattern.permute.xlu0 0
        %1187 = vperm.xlu0 %1186, %v1155
        %v1188 = vpop.permute.xlu0 %1187
        %1191 = vset.pattern.permute.xlu0 0
        %1192 = vperm.xlu0 %1191, %v1156
        %v1193 = vpop.permute.xlu0 %1192
        %1196 = vset.pattern.permute.xlu0 0
        %1197 = vperm.xlu0 %1196, %v1157
        %v1198 = vpop.permute.xlu0 %1197
        %1201 = vset.pattern.permute.xlu0 0
        %1202 = vperm.xlu0 %1201, %v1158
        %v1203 = vpop.permute.xlu0 %1202
        %1206 = vset.pattern.permute.xlu0 0
        %1207 = vperm.xlu0 %1206, %v1159
        %v1208 = vpop.permute.xlu0 %1207
        %1211 = vset.pattern.permute.xlu0 0
        %1212 = vperm.xlu0 %1211, %v1160
        %v1213 = vpop.permute.xlu0 %1212
        %1216 = vset.pattern.permute.xlu0 0
        %1217 = vperm.xlu0 %1216, %v1161
        %v1218 = vpop.permute.xlu0 %1217
        %v1220 = vmul.f32 %v1183, %v219
        %v1221 = vmul.f32 %v1188, %v219
        %v1222 = vmul.f32 %v1193, %v219
        %v1223 = vmul.f32 %v1198, %v219
        %v1224 = vmul.f32 %v1203, %v219
        %v1225 = vmul.f32 %v1208, %v219
        %v1226 = vmul.f32 %v1213, %v219
        %v1227 = vmul.f32 %v1218, %v219
        %1229 = vset.pattern.permute.xlu0 0
        %1230 = vperm.xlu0 %1229, %v1163
        %v1231 = vpop.permute.xlu0 %1230
        %1234 = vset.pattern.permute.xlu0 0
        %1235 = vperm.xlu0 %1234, %v1164
        %v1236 = vpop.permute.xlu0 %1235
        %1239 = vset.pattern.permute.xlu0 0
        %1240 = vperm.xlu0 %1239, %v1165
        %v1241 = vpop.permute.xlu0 %1240
        %1244 = vset.pattern.permute.xlu0 0
        %1245 = vperm.xlu0 %1244, %v1166
        %v1246 = vpop.permute.xlu0 %1245
        %1249 = vset.pattern.permute.xlu0 0
        %1250 = vperm.xlu0 %1249, %v1167
        %v1251 = vpop.permute.xlu0 %1250
        %1254 = vset.pattern.permute.xlu0 0
        %1255 = vperm.xlu0 %1254, %v1168
        %v1256 = vpop.permute.xlu0 %1255
        %1259 = vset.pattern.permute.xlu0 0
        %1260 = vperm.xlu0 %1259, %v1169
        %v1261 = vpop.permute.xlu0 %1260
        %1264 = vset.pattern.permute.xlu0 0
        %1265 = vperm.xlu0 %1264, %v1170
        %v1266 = vpop.permute.xlu0 %1265
        %v1268 = vadd.f32 %v1220, %v1231
        %v1269 = vadd.f32 %v1221, %v1236
        %v1270 = vadd.f32 %v1222, %v1241
        %v1271 = vadd.f32 %v1223, %v1246
        %v1272 = vadd.f32 %v1224, %v1251
        %v1273 = vadd.f32 %v1225, %v1256
        %v1274 = vadd.f32 %v1226, %v1261
        %v1275 = vadd.f32 %v1227, %v1266
        %v1276 = vtanh.pop %v1268
        %v1277 = vtanh.pop %v1269
        %v1278 = vtanh.pop %v1270
        %v1279 = vtanh.pop %v1271
        %v1280 = vtanh.pop %v1272
        %v1281 = vtanh.pop %v1273
        %v1282 = vtanh.pop %v1274
        %v1283 = vtanh.pop %v1275
        %1285 = vset.pattern.permute.xlu0 0
        %1286 = vperm.xlu0 %1285, %v1172
        %v1287 = vpop.permute.xlu0 %1286
        %1290 = vset.pattern.permute.xlu0 0
        %1291 = vperm.xlu0 %1290, %v1173
        %v1292 = vpop.permute.xlu0 %1291
        %1295 = vset.pattern.permute.xlu0 0
        %1296 = vperm.xlu0 %1295, %v1174
        %v1297 = vpop.permute.xlu0 %1296
        %1300 = vset.pattern.permute.xlu0 0
        %1301 = vperm.xlu0 %1300, %v1175
        %v1302 = vpop.permute.xlu0 %1301
        %1305 = vset.pattern.permute.xlu0 0
        %1306 = vperm.xlu0 %1305, %v1176
        %v1307 = vpop.permute.xlu0 %1306
        %1310 = vset.pattern.permute.xlu0 0
        %1311 = vperm.xlu0 %1310, %v1177
        %v1312 = vpop.permute.xlu0 %1311
        %1315 = vset.pattern.permute.xlu0 0
        %1316 = vperm.xlu0 %1315, %v1178
        %v1317 = vpop.permute.xlu0 %1316
        %1320 = vset.pattern.permute.xlu0 0
        %1321 = vperm.xlu0 %1320, %v1179
        %v1322 = vpop.permute.xlu0 %1321
        %v1324 = vmul.f32 %v1276, %v1287
        %v1325 = vmul.f32 %v1277, %v1292
        %v1326 = vmul.f32 %v1278, %v1297
        %v1327 = vmul.f32 %v1279, %v1302
        %v1328 = vmul.f32 %v1280, %v1307
        %v1329 = vmul.f32 %v1281, %v1312
        %v1330 = vmul.f32 %v1282, %v1317
        %v1331 = vmul.f32 %v1283, %v1322
        %v1332 = vadd.f32 %v1324, %v1325
        %v1333 = vadd.f32 %v1332, %v1326
        %v1334 = vadd.f32 %v1333, %v1327
        %v1335 = vadd.f32 %v1334, %v1328
        %v1336 = vadd.f32 %v1335, %v1329
        %v1337 = vadd.f32 %v1336, %v1330
        %v1338 = vadd.f32 %v1337, %v1331
        %v1339 = vadd.f32 %v1152, %v1338
        %s1340 = scalar_lea.vmem %s1, 384
        %v1341 = vld [vmem:[%s1340] sm:$0xff]
        %v1342 = vld [vmem:[%s1340 + $0x8] sm:$0xff]
        %v1343 = vld [vmem:[%s1340 + $0x10] sm:$0xff]
        %v1344 = vld [vmem:[%s1340 + $0x18] sm:$0xff]
        %v1345 = vld [vmem:[%s1340 + $0x20] sm:$0xff]
        %v1346 = vld [vmem:[%s1340 + $0x28] sm:$0xff]
        %v1347 = vld [vmem:[%s1340 + $0x30] sm:$0xff]
        %v1348 = vld [vmem:[%s1340 + $0x38] sm:$0xff]
        %s1349 = scalar_lea.vmem %s2, 384
        %v1350 = vld [vmem:[%s1349] sm:$0xff]
        %v1351 = vld [vmem:[%s1349 + $0x8] sm:$0xff]
        %v1352 = vld [vmem:[%s1349 + $0x10] sm:$0xff]
        %v1353 = vld [vmem:[%s1349 + $0x18] sm:$0xff]
        %v1354 = vld [vmem:[%s1349 + $0x20] sm:$0xff]
        %v1355 = vld [vmem:[%s1349 + $0x28] sm:$0xff]
        %v1356 = vld [vmem:[%s1349 + $0x30] sm:$0xff]
        %v1357 = vld [vmem:[%s1349 + $0x38] sm:$0xff]
        %s1358 = scalar_lea.vmem %s3, 384
        %v1359 = vld [vmem:[%s1358] sm:$0xff]
        %v1360 = vld [vmem:[%s1358 + $0x8] sm:$0xff]
        %v1361 = vld [vmem:[%s1358 + $0x10] sm:$0xff]
        %v1362 = vld [vmem:[%s1358 + $0x18] sm:$0xff]
        %v1363 = vld [vmem:[%s1358 + $0x20] sm:$0xff]
        %v1364 = vld [vmem:[%s1358 + $0x28] sm:$0xff]
        %v1365 = vld [vmem:[%s1358 + $0x30] sm:$0xff]
        %v1366 = vld [vmem:[%s1358 + $0x38] sm:$0xff]
        %1368 = vset.pattern.permute.xlu0 0
        %1369 = vperm.xlu0 %1368, %v1341
        %v1370 = vpop.permute.xlu0 %1369
        %1373 = vset.pattern.permute.xlu0 0
        %1374 = vperm.xlu0 %1373, %v1342
        %v1375 = vpop.permute.xlu0 %1374
        %1378 = vset.pattern.permute.xlu0 0
        %1379 = vperm.xlu0 %1378, %v1343
        %v1380 = vpop.permute.xlu0 %1379
        %1383 = vset.pattern.permute.xlu0 0
        %1384 = vperm.xlu0 %1383, %v1344
        %v1385 = vpop.permute.xlu0 %1384
        %1388 = vset.pattern.permute.xlu0 0
        %1389 = vperm.xlu0 %1388, %v1345
        %v1390 = vpop.permute.xlu0 %1389
        %1393 = vset.pattern.permute.xlu0 0
        %1394 = vperm.xlu0 %1393, %v1346
        %v1395 = vpop.permute.xlu0 %1394
        %1398 = vset.pattern.permute.xlu0 0
        %1399 = vperm.xlu0 %1398, %v1347
        %v1400 = vpop.permute.xlu0 %1399
        %1403 = vset.pattern.permute.xlu0 0
        %1404 = vperm.xlu0 %1403, %v1348
        %v1405 = vpop.permute.xlu0 %1404
        %v1407 = vmul.f32 %v1370, %v219
        %v1408 = vmul.f32 %v1375, %v219
        %v1409 = vmul.f32 %v1380, %v219
        %v1410 = vmul.f32 %v1385, %v219
        %v1411 = vmul.f32 %v1390, %v219
        %v1412 = vmul.f32 %v1395, %v219
        %v1413 = vmul.f32 %v1400, %v219
        %v1414 = vmul.f32 %v1405, %v219
        %1416 = vset.pattern.permute.xlu0 0
        %1417 = vperm.xlu0 %1416, %v1350
        %v1418 = vpop.permute.xlu0 %1417
        %1421 = vset.pattern.permute.xlu0 0
        %1422 = vperm.xlu0 %1421, %v1351
        %v1423 = vpop.permute.xlu0 %1422
        %1426 = vset.pattern.permute.xlu0 0
        %1427 = vperm.xlu0 %1426, %v1352
        %v1428 = vpop.permute.xlu0 %1427
        %1431 = vset.pattern.permute.xlu0 0
        %1432 = vperm.xlu0 %1431, %v1353
        %v1433 = vpop.permute.xlu0 %1432
        %1436 = vset.pattern.permute.xlu0 0
        %1437 = vperm.xlu0 %1436, %v1354
        %v1438 = vpop.permute.xlu0 %1437
        %1441 = vset.pattern.permute.xlu0 0
        %1442 = vperm.xlu0 %1441, %v1355
        %v1443 = vpop.permute.xlu0 %1442
        %1446 = vset.pattern.permute.xlu0 0
        %1447 = vperm.xlu0 %1446, %v1356
        %v1448 = vpop.permute.xlu0 %1447
        %1451 = vset.pattern.permute.xlu0 0
        %1452 = vperm.xlu0 %1451, %v1357
        %v1453 = vpop.permute.xlu0 %1452
        %v1455 = vadd.f32 %v1407, %v1418
        %v1456 = vadd.f32 %v1408, %v1423
        %v1457 = vadd.f32 %v1409, %v1428
        %v1458 = vadd.f32 %v1410, %v1433
        %v1459 = vadd.f32 %v1411, %v1438
        %v1460 = vadd.f32 %v1412, %v1443
        %v1461 = vadd.f32 %v1413, %v1448
        %v1462 = vadd.f32 %v1414, %v1453
        %v1463 = vtanh.pop %v1455
        %v1464 = vtanh.pop %v1456
        %v1465 = vtanh.pop %v1457
        %v1466 = vtanh.pop %v1458
        %v1467 = vtanh.pop %v1459
        %v1468 = vtanh.pop %v1460
        %v1469 = vtanh.pop %v1461
        %v1470 = vtanh.pop %v1462
        %1472 = vset.pattern.permute.xlu0 0
        %1473 = vperm.xlu0 %1472, %v1359
        %v1474 = vpop.permute.xlu0 %1473
        %1477 = vset.pattern.permute.xlu0 0
        %1478 = vperm.xlu0 %1477, %v1360
        %v1479 = vpop.permute.xlu0 %1478
        %1482 = vset.pattern.permute.xlu0 0
        %1483 = vperm.xlu0 %1482, %v1361
        %v1484 = vpop.permute.xlu0 %1483
        %1487 = vset.pattern.permute.xlu0 0
        %1488 = vperm.xlu0 %1487, %v1362
        %v1489 = vpop.permute.xlu0 %1488
        %1492 = vset.pattern.permute.xlu0 0
        %1493 = vperm.xlu0 %1492, %v1363
        %v1494 = vpop.permute.xlu0 %1493
        %1497 = vset.pattern.permute.xlu0 0
        %1498 = vperm.xlu0 %1497, %v1364
        %v1499 = vpop.permute.xlu0 %1498
        %1502 = vset.pattern.permute.xlu0 0
        %1503 = vperm.xlu0 %1502, %v1365
        %v1504 = vpop.permute.xlu0 %1503
        %1507 = vset.pattern.permute.xlu0 0
        %1508 = vperm.xlu0 %1507, %v1366
        %v1509 = vpop.permute.xlu0 %1508
        %v1511 = vmul.f32 %v1463, %v1474
        %v1512 = vmul.f32 %v1464, %v1479
        %v1513 = vmul.f32 %v1465, %v1484
        %v1514 = vmul.f32 %v1466, %v1489
        %v1515 = vmul.f32 %v1467, %v1494
        %v1516 = vmul.f32 %v1468, %v1499
        %v1517 = vmul.f32 %v1469, %v1504
        %v1518 = vmul.f32 %v1470, %v1509
        %v1519 = vadd.f32 %v1511, %v1512
        %v1520 = vadd.f32 %v1519, %v1513
        %v1521 = vadd.f32 %v1520, %v1514
        %v1522 = vadd.f32 %v1521, %v1515
        %v1523 = vadd.f32 %v1522, %v1516
        %v1524 = vadd.f32 %v1523, %v1517
        %v1525 = vadd.f32 %v1524, %v1518
        %v1526 = vadd.f32 %v1339, %v1525
        %s1527 = scalar_lea.vmem %s1, 448
        %v1528 = vld [vmem:[%s1527] sm:$0xff]
        %v1529 = vld [vmem:[%s1527 + $0x8] sm:$0xff]
        %v1530 = vld [vmem:[%s1527 + $0x10] sm:$0xff]
        %v1531 = vld [vmem:[%s1527 + $0x18] sm:$0xff]
        %v1532 = vld [vmem:[%s1527 + $0x20] sm:$0xff]
        %v1533 = vld [vmem:[%s1527 + $0x28] sm:$0xff]
        %v1534 = vld [vmem:[%s1527 + $0x30] sm:$0xff]
        %v1535 = vld [vmem:[%s1527 + $0x38] sm:$0xff]
        %s1536 = scalar_lea.vmem %s2, 448
        %v1537 = vld [vmem:[%s1536] sm:$0xff]
        %v1538 = vld [vmem:[%s1536 + $0x8] sm:$0xff]
        %v1539 = vld [vmem:[%s1536 + $0x10] sm:$0xff]
        %v1540 = vld [vmem:[%s1536 + $0x18] sm:$0xff]
        %v1541 = vld [vmem:[%s1536 + $0x20] sm:$0xff]
        %v1542 = vld [vmem:[%s1536 + $0x28] sm:$0xff]
        %v1543 = vld [vmem:[%s1536 + $0x30] sm:$0xff]
        %v1544 = vld [vmem:[%s1536 + $0x38] sm:$0xff]
        %s1545 = scalar_lea.vmem %s3, 448
        %v1546 = vld [vmem:[%s1545] sm:$0xff]
        %v1547 = vld [vmem:[%s1545 + $0x8] sm:$0xff]
        %v1548 = vld [vmem:[%s1545 + $0x10] sm:$0xff]
        %v1549 = vld [vmem:[%s1545 + $0x18] sm:$0xff]
        %v1550 = vld [vmem:[%s1545 + $0x20] sm:$0xff]
        %v1551 = vld [vmem:[%s1545 + $0x28] sm:$0xff]
        %v1552 = vld [vmem:[%s1545 + $0x30] sm:$0xff]
        %v1553 = vld [vmem:[%s1545 + $0x38] sm:$0xff]
        %1555 = vset.pattern.permute.xlu0 0
        %1556 = vperm.xlu0 %1555, %v1528
        %v1557 = vpop.permute.xlu0 %1556
        %1560 = vset.pattern.permute.xlu0 0
        %1561 = vperm.xlu0 %1560, %v1529
        %v1562 = vpop.permute.xlu0 %1561
        %1565 = vset.pattern.permute.xlu0 0
        %1566 = vperm.xlu0 %1565, %v1530
        %v1567 = vpop.permute.xlu0 %1566
        %1570 = vset.pattern.permute.xlu0 0
        %1571 = vperm.xlu0 %1570, %v1531
        %v1572 = vpop.permute.xlu0 %1571
        %1575 = vset.pattern.permute.xlu0 0
        %1576 = vperm.xlu0 %1575, %v1532
        %v1577 = vpop.permute.xlu0 %1576
        %1580 = vset.pattern.permute.xlu0 0
        %1581 = vperm.xlu0 %1580, %v1533
        %v1582 = vpop.permute.xlu0 %1581
        %1585 = vset.pattern.permute.xlu0 0
        %1586 = vperm.xlu0 %1585, %v1534
        %v1587 = vpop.permute.xlu0 %1586
        %1590 = vset.pattern.permute.xlu0 0
        %1591 = vperm.xlu0 %1590, %v1535
        %v1592 = vpop.permute.xlu0 %1591
        %v1594 = vmul.f32 %v1557, %v219
        %v1595 = vmul.f32 %v1562, %v219
        %v1596 = vmul.f32 %v1567, %v219
        %v1597 = vmul.f32 %v1572, %v219
        %v1598 = vmul.f32 %v1577, %v219
        %v1599 = vmul.f32 %v1582, %v219
        %v1600 = vmul.f32 %v1587, %v219
        %v1601 = vmul.f32 %v1592, %v219
        %1603 = vset.pattern.permute.xlu0 0
        %1604 = vperm.xlu0 %1603, %v1537
        %v1605 = vpop.permute.xlu0 %1604
        %1608 = vset.pattern.permute.xlu0 0
        %1609 = vperm.xlu0 %1608, %v1538
        %v1610 = vpop.permute.xlu0 %1609
        %1613 = vset.pattern.permute.xlu0 0
        %1614 = vperm.xlu0 %1613, %v1539
        %v1615 = vpop.permute.xlu0 %1614
        %1618 = vset.pattern.permute.xlu0 0
        %1619 = vperm.xlu0 %1618, %v1540
        %v1620 = vpop.permute.xlu0 %1619
        %1623 = vset.pattern.permute.xlu0 0
        %1624 = vperm.xlu0 %1623, %v1541
        %v1625 = vpop.permute.xlu0 %1624
        %1628 = vset.pattern.permute.xlu0 0
        %1629 = vperm.xlu0 %1628, %v1542
        %v1630 = vpop.permute.xlu0 %1629
        %1633 = vset.pattern.permute.xlu0 0
        %1634 = vperm.xlu0 %1633, %v1543
        %v1635 = vpop.permute.xlu0 %1634
        %1638 = vset.pattern.permute.xlu0 0
        %1639 = vperm.xlu0 %1638, %v1544
        %v1640 = vpop.permute.xlu0 %1639
        %v1642 = vadd.f32 %v1594, %v1605
        %v1643 = vadd.f32 %v1595, %v1610
        %v1644 = vadd.f32 %v1596, %v1615
        %v1645 = vadd.f32 %v1597, %v1620
        %v1646 = vadd.f32 %v1598, %v1625
        %v1647 = vadd.f32 %v1599, %v1630
        %v1648 = vadd.f32 %v1600, %v1635
        %v1649 = vadd.f32 %v1601, %v1640
        %v1650 = vtanh.pop %v1642
        %v1651 = vtanh.pop %v1643
        %v1652 = vtanh.pop %v1644
        %v1653 = vtanh.pop %v1645
        %v1654 = vtanh.pop %v1646
        %v1655 = vtanh.pop %v1647
        %v1656 = vtanh.pop %v1648
        %v1657 = vtanh.pop %v1649
        %1659 = vset.pattern.permute.xlu0 0
        %1660 = vperm.xlu0 %1659, %v1546
        %v1661 = vpop.permute.xlu0 %1660
        %1664 = vset.pattern.permute.xlu0 0
        %1665 = vperm.xlu0 %1664, %v1547
        %v1666 = vpop.permute.xlu0 %1665
        %1669 = vset.pattern.permute.xlu0 0
        %1670 = vperm.xlu0 %1669, %v1548
        %v1671 = vpop.permute.xlu0 %1670
        %1674 = vset.pattern.permute.xlu0 0
        %1675 = vperm.xlu0 %1674, %v1549
        %v1676 = vpop.permute.xlu0 %1675
        %1679 = vset.pattern.permute.xlu0 0
        %1680 = vperm.xlu0 %1679, %v1550
        %v1681 = vpop.permute.xlu0 %1680
        %1684 = vset.pattern.permute.xlu0 0
        %1685 = vperm.xlu0 %1684, %v1551
        %v1686 = vpop.permute.xlu0 %1685
        %1689 = vset.pattern.permute.xlu0 0
        %1690 = vperm.xlu0 %1689, %v1552
        %v1691 = vpop.permute.xlu0 %1690
        %1694 = vset.pattern.permute.xlu0 0
        %1695 = vperm.xlu0 %1694, %v1553
        %v1696 = vpop.permute.xlu0 %1695
        %v1698 = vmul.f32 %v1650, %v1661
        %v1699 = vmul.f32 %v1651, %v1666
        %v1700 = vmul.f32 %v1652, %v1671
        %v1701 = vmul.f32 %v1653, %v1676
        %v1702 = vmul.f32 %v1654, %v1681
        %v1703 = vmul.f32 %v1655, %v1686
        %v1704 = vmul.f32 %v1656, %v1691
        %v1705 = vmul.f32 %v1657, %v1696
        %v1706 = vadd.f32 %v1698, %v1699
        %v1707 = vadd.f32 %v1706, %v1700
        %v1708 = vadd.f32 %v1707, %v1701
        %v1709 = vadd.f32 %v1708, %v1702
        %v1710 = vadd.f32 %v1709, %v1703
        %v1711 = vadd.f32 %v1710, %v1704
        %v1712 = vadd.f32 %v1711, %v1705
        %v1713 = vadd.f32 %v1526, %v1712
        %v1714 = vrot.slane %v1713, 4
        %v1715 = vadd.f32 %v1713, %v1714
        %v1716 = vrot.slane %v1715, 2
        %v1717 = vadd.f32 %v1715, %v1716
        %v1718 = vrot.slane %v1717, 1
        %v1719 = vadd.f32 %v1717, %v1718
        %s1720 = sld [smem:[#allocation2]]
        %v1721 = vstv %s1720
        %v1722 = vadd.f32 %v1719, %v1721
        %1723 = vst [vmem:[%s213] sm:$0x1] %v1722
        %s1724 = sand.u32 %s138, 1
        %s1725 = scalar_lea.sflag [#allocation4], %s1724
        %s1726 = sand.u32 %s138, 1
        %s1727 = scalar_lea.vmem [#allocation3], %s1726
        // Predicated region
        $region41: #{_bias_net_forward_lane.1} parent=39 // pred_check
          %p1728 = pneg %p148
        $region42: #{_bias_net_forward_lane.1} parent=39 // pred_check_branch
          %1730 = sbr.rel (%p1728) target = $region44
        $region43: #{_bias_net_forward_lane.1} parent=39 // pred_region
          %1732 = vsyncadd %s1725, 0
          %s1733 = scalar_lea.hbm %s5, %s20
          %s1735 = sshll.u32 %s1727, 4
          %s1736 = int_to_ptr.vmem [resolvable:$true] %s1735
          %s1737 = sshll.u32 %s1733, 4
          %s1738 = int_to_ptr.hbm [resolvable:$true] %s1737
          %1740 = dma.vmem_to_hbm [thread:$0]  %s1736, 16, %s1738, %s1725
        $region44: #{_bias_net_forward_lane.1} parent=39 // pred_fallthru
          _
      $region40: #{_bias_net_forward_lane.1} parent=5 // pred_fallthru
        _
      %p1741 = scmp.le.s32.totalorder 2, %s15
      // Predicated region
      $region45: #{_bias_net_forward_lane.1} parent=5 // pred_check
        %p1742 = pneg %p1741
      $region46: #{_bias_net_forward_lane.1} parent=5 // pred_check_branch
        %1744 = sbr.rel (%p1742) target = $region48
      $region47: #{_bias_net_forward_lane.1} parent=5 // pred_region
        %s1745 = ssub.s32 %s15, 2
        // Predicated region
        $region49: #{_bias_net_forward_lane.1} parent=47 // pred_check
          %p1746 = pneg %p154
        $region50: #{_bias_net_forward_lane.1} parent=47 // pred_check_branch
          %1748 = sbr.rel (%p1746) target = $region52
        $region51: #{_bias_net_forward_lane.1} parent=47 // pred_region
          %s1749 = sand.u32 %s139, 1
          %s1750 = scalar_lea.sflag [#allocation4], %s1749
          %s1751 = sand.u32 %s139, 1
          %s1752 = scalar_lea.vmem [#allocation3], %s1751
          %1754 = dma.done %s1750, 16
        $region52: #{_bias_net_forward_lane.1} parent=47 // pred_fallthru
          _
      $region48: #{_bias_net_forward_lane.1} parent=5 // pred_fallthru
        _
    $region6: #{_bias_net_forward_lane.1} parent=1 // loop_footer
      %s19 = sadd.s32 1, %s15
    $region7: #{_bias_net_forward_lane.1} parent=1 // loop_footer_branch
      %14 = sbr.rel target = $region3
    $region8: #{_bias_net_forward_lane.1} parent=1 // loop_exit
      _
    %1755 = vsyncpa [#allocation4], 1
    %s1756 = scalar_lea.sflag [#allocation4], 1
    %1757 = vsyncpa %s1756, 1

</llo_original>
